<compile_context>
chip_gen: v7x
topology: tpu7x:2x2x1
jax: 0.10.0
libtpu: 0.0.40
codegen_flags: <defaults>
</compile_context>

<pallas_src>
import numpy as np
import jax
import jax.numpy as jnp
from jax.experimental import pallas as pl
from jax.experimental.pallas import tpu as pltpu


# ----------------------------------------------------------------------------
# Fused decoder kernel: (fc+deconv2)(+ReLU) -> deconv1(+sigmoid)
# ----------------------------------------------------------------------------
def _decoder_kernel(z_ref, a_ref, bf_ref, m1_ref, b1_ref, o_ref):
    # z:(BT,L) f32   a:(L,F2p) bf16   bf:(1,F2p) f32
    # m1:(F2p,F3p) bf16   b1:(1,F3p) f32   o:(BT,F3p) f32
    h = jnp.dot(z_ref[...].astype(jnp.bfloat16), a_ref[...],
                preferred_element_type=jnp.float32) + bf_ref[...]
    h = jnp.maximum(h, 0.0)                                   # ReLU (f32)
    y = jnp.dot(h.astype(jnp.bfloat16), m1_ref[...],
                preferred_element_type=jnp.float32) + b1_ref[...]
    # Numerically stable sigmoid: exp argument is always <= 0 (no overflow).
    ey = jnp.exp(-jnp.abs(y))
    inv = 1.0 / (1.0 + ey)
    o_ref[...] = jnp.where(y >= 0.0, inv, ey * inv)


# ----------------------------------------------------------------------------
# One-time parameter preparation (hoisted out of the forward path)
# ----------------------------------------------------------------------------
def _deconv_operator(w, H, W, stride, pad):
    """Fold ConvTranspose2d weights into a dense linear operator.

    w: (Cin, Cout, K, K).  Returns (M, Ho, Wo) with M: (Cin*H*W, Cout*Ho*Wo)
    such that flat_out = flat_in @ M reproduces PyTorch
    ConvTranspose2d(stride, padding=pad) on NCHW-flattened vectors.
    """
    Cin, Cout, K, _ = w.shape
    Ho = (H - 1) * stride - 2 * pad + K
    Wo = (W - 1) * stride - 2 * pad + K
    M = np.zeros((Cin, H, W, Cout, Ho, Wo), np.float64)
    for ih in range(H):
        for kh in range(K):
            oh = ih * stride - pad + kh
            if not (0 <= oh < Ho):
                continue
            for iw in range(W):
                for kw in range(K):
                    ow = iw * stride - pad + kw
                    if not (0 <= ow < Wo):
                        continue
                    M[:, ih, iw, :, oh, ow] += w[:, :, kh, kw]
    return M.reshape(Cin * H * W, Cout * Ho * Wo), Ho, Wo


def _pad_to(x, axis, mult):
    n = x.shape[axis]
    target = ((n + mult - 1) // mult) * mult
    if target == n:
        return x
    pads = [(0, 0)] * x.ndim
    pads[axis] = (0, target - n)
    return np.pad(x, pads)


def prepare_decoder_params(params):
    fc_w = np.asarray(params["fc_w"], np.float64)      # (F1, L) PyTorch layout
    fc_b = np.asarray(params["fc_b"], np.float64)      # (F1,)
    w2 = np.asarray(params["conv2_w"], np.float64)     # (2c, c, 4, 4)
    b2 = np.asarray(params["conv2_b"], np.float64)     # (c,)
    w1 = np.asarray(params["conv1_w"], np.float64)     # (c, 1, 4, 4)
    b1 = np.asarray(params["conv1_b"], np.float64)     # (1,)

    m2, H2, W2 = _deconv_operator(w2, 7, 7, 2, 1)      # (2c*49, c*196)
    m1, H1, W1 = _deconv_operator(w1, H2, W2, 2, 1)    # (c*196, 784)

    # Algebraic fusion of fc into deconv2 (no nonlinearity between them).
    a = fc_w.T @ m2                                    # (L, F2)
    b2_row = np.repeat(b2, H2 * W2)                    # (F2,)
    b_fused = fc_b @ m2 + b2_row                       # (F2,)
    b1_row = np.repeat(b1, H1 * W1)                    # (F3,)
    F3 = m1.shape[1]

    # Zero-pad contraction / lane dims to 128 multiples (full vregs, no
    # ragged MXU pass).  Padded h columns are relu(0+0)=0 and multiply zero
    # m1 rows, so results are unchanged; padded output columns are sliced
    # off in the wrapper.
    a = _pad_to(a, 1, 128)
    b_fused = _pad_to(b_fused, 0, 128)
    m1 = _pad_to(_pad_to(m1, 0, 128), 1, 128)
    b1_row = _pad_to(b1_row, 0, 128)

    return {
        # bf16 operator matrices: halve weight DMA, native MXU bf16 path.
        "a": jnp.asarray(a, jnp.bfloat16),                           # (L, F2p)
        "b_fused": jnp.asarray(b_fused.reshape(1, -1), jnp.float32), # (1, F2p)
        "m1": jnp.asarray(m1, jnp.bfloat16),                         # (F2p,F3p)
        "b1": jnp.asarray(b1_row.reshape(1, -1), jnp.float32),       # (1, F3p)
        "f3": F3,
        "out_hw": (H1, W1),
    }


# ----------------------------------------------------------------------------
# Decoder forward (matches the PyTorch module)
# ----------------------------------------------------------------------------
def decoder_forward(prepped, z):
    z = jnp.asarray(z, jnp.float32)
    B, L = z.shape
    F2p = prepped["a"].shape[1]
    F3p = prepped["m1"].shape[1]
    F3 = prepped["f3"]
    Ho, Wo = prepped["out_hw"]

    # Batch tiling: whole batch as one tile for small B; 256-row tiles for
    # large B (full MXU rows, amortized grid-step overhead, >=2 parallel
    # steps so both v7x TensorCores are used).
    if B <= 256:
        bt, Bp = B, B
    else:
        bt = 256
        Bp = ((B + bt - 1) // bt) * bt
    zp = z if Bp == B else jnp.pad(z, ((0, Bp - B), (0, 0)))
    grid = (Bp // bt,)

    out = pl.pallas_call(
        _decoder_kernel,
        grid=grid,
        in_specs=[
            pl.BlockSpec((bt, L), lambda i: (i, 0)),     # z batch tile
            pl.BlockSpec((L, F2p), lambda i: (0, 0)),    # fused fc+deconv2 op
            pl.BlockSpec((1, F2p), lambda i: (0, 0)),    # fused bias row
            pl.BlockSpec((F2p, F3p), lambda i: (0, 0)),  # deconv1 operator
            pl.BlockSpec((1, F3p), lambda i: (0, 0)),    # conv1 bias row
        ],
        out_specs=pl.BlockSpec((bt, F3p), lambda i: (i, 0)),  # lane-dense out
        out_shape=jax.ShapeDtypeStruct((Bp, F3p), jnp.float32),
        compiler_params=pltpu.CompilerParams(
            dimension_semantics=("parallel",)),
    )(zp, prepped["a"], prepped["b_fused"], prepped["m1"], prepped["b1"])

    # Strip batch/lane padding, reshape back to NCHW.
    return out[:B, :F3].reshape(B, 1, Ho, Wo)


# ----------------------------------------------------------------------------
# Pure numpy reference of PyTorch semantics (for verification only)
# ----------------------------------------------------------------------------
def _ref_conv_transpose(x, w, b, stride, pad):
    B, Cin, H, W = x.shape
    _, Cout, K, _ = w.shape
    Ho = (H - 1) * stride - 2 * pad + K
    Wo = (W - 1) * stride - 2 * pad + K
    out = np.zeros((B, Cout, Ho, Wo), np.float64)
    for ih in range(H):
        for iw in range(W):
            for kh in range(K):
                for kw in range(K):
                    oh = ih * stride - pad + kh
                    ow = iw * stride - pad + kw
                    if 0 <= oh < Ho and 0 <= ow < Wo:
                        out[:, :, oh, ow] += np.einsum(
                            "bc,cd->bd", x[:, :, ih, iw], w[:, :, kh, kw])
    return out + b.reshape(1, Cout, 1, 1)


def _ref_decoder(params, z):
    c = params["capacity"]
    W = np.asarray(params["fc_w"], np.float64)
    b = np.asarray(params["fc_b"], np.float64)
    h = np.asarray(z, np.float64) @ W.T + b
    h = h.reshape(z.shape[0], 2 * c, 7, 7)
    h = np.maximum(
        _ref_conv_transpose(h, np.asarray(params["conv2_w"], np.float64),
                            np.asarray(params["conv2_b"], np.float64), 2, 1),
        0.0)
    y = _ref_conv_transpose(h, np.asarray(params["conv1_w"], np.float64),
                            np.asarray(params["conv1_b"], np.float64), 2, 1)
    return 1.0 / (1.0 + np.exp(-y))


# ----------------------------------------------------------------------------
if __name__ == "__main__":
    capacity = 4          # c
    latent_dims = 8
    B = 2
    F = capacity * 2 * 7 * 7

    key = jax.random.PRNGKey(0)
    k1, k2, k3, k4, k5, k6, k7 = jax.random.split(key, 7)
    params = {
        "capacity": capacity,
        "fc_w": 0.1 * jax.random.normal(k1, (F, latent_dims), jnp.float32),
        "fc_b": 0.01 * jax.random.normal(k2, (F,), jnp.float32),
        "conv2_w": 0.1 * jax.random.normal(
            k3, (2 * capacity, capacity, 4, 4), jnp.float32),
        "conv2_b": 0.01 * jax.random.normal(k4, (capacity,), jnp.float32),
        "conv1_w": 0.1 * jax.random.normal(k5, (capacity, 1, 4, 4), jnp.float32),
        "conv1_b": 0.01 * jax.random.normal(k6, (1,), jnp.float32),
    }
    z = jax.random.normal(k7, (B, latent_dims), jnp.float32)

    prepped = prepare_decoder_params(params)   # one-time weight prep (hoisted)
    out = decoder_forward(prepped, z)
    out = jax.block_until_ready(out)

    assert out.shape == (B, 1, 28, 28), out.shape

    ref = _ref_decoder(params, z)
    # bf16 operator matrices (f32 accumulation) -> ~1e-3 level error on
    # sigmoid outputs; 1e-2 tolerance is comfortably tight for [0,1] values.
    np.testing.assert_allclose(np.asarray(out, np.float64), ref,
                               atol=1e-2, rtol=1e-2)

    print("KERNEL_OK")
</pallas_src>

<mosaic_0001>
module attributes {stable_mosaic.version = 11 : i64} {
  func.func @_decoder_kernel(%arg0: i32, %arg1: memref<2x8xf32, #tpu.memory_space<vmem>>, %arg2: memref<8x896xbf16, #tpu.memory_space<vmem>>, %arg3: memref<1x896xf32, #tpu.memory_space<vmem>>, %arg4: memref<896x896xbf16, #tpu.memory_space<vmem>>, %arg5: memref<1x896xf32, #tpu.memory_space<vmem>>, %arg6: memref<2x896xf32, #tpu.memory_space<vmem>>) attributes {dimension_semantics = [#tpu.dimension_semantics<parallel>], iteration_bounds = array<i64: 1>, scalar_prefetch = 0 : i64, scratch_operands = 0 : i64, tpu.core_type = #tpu.core_type<tc>, window_params = [{transform_indices = @transform_0, window_bounds = array<i64: 2, 8>}, {pipeline_mode = #tpu.pipeline_mode<synchronous>, transform_indices = @transform_1, window_bounds = array<i64: 8, 896>}, {pipeline_mode = #tpu.pipeline_mode<synchronous>, transform_indices = @transform_2, window_bounds = array<i64: 1, 896>}, {pipeline_mode = #tpu.pipeline_mode<synchronous>, transform_indices = @transform_3, window_bounds = array<i64: 896, 896>}, {pipeline_mode = #tpu.pipeline_mode<synchronous>, transform_indices = @transform_4, window_bounds = array<i64: 1, 896>}, {transform_indices = @transform_5, window_bounds = array<i64: 2, 896>}]} {
    %c0 = arith.constant 0 : index
    %c0_0 = arith.constant 0 : index
    %0 = vector.load %arg1[%c0, %c0_0] : memref<2x8xf32, #tpu.memory_space<vmem>>, vector<2x8xf32>
    %1 = arith.truncf %0 : vector<2x8xf32> to vector<2x8xbf16>
    %c0_1 = arith.constant 0 : index
    %c0_2 = arith.constant 0 : index
    %2 = vector.load %arg2[%c0_1, %c0_2] : memref<8x896xbf16, #tpu.memory_space<vmem>>, vector<8x896xbf16>
    %cst = arith.constant dense<0.000000e+00> : vector<2x896xf32>
    %3 = tpu.matmul %1, %2, %cst {dimension_numbers = #tpu.dot_dimension_numbers<[1], [0], [0], [1], [0, 0, 1, 1], [], []>} : vector<2x8xbf16>, vector<8x896xbf16>, vector<2x896xf32> -> vector<2x896xf32>
    %c0_3 = arith.constant 0 : index
    %c0_4 = arith.constant 0 : index
    %4 = vector.load %arg3[%c0_3, %c0_4] : memref<1x896xf32, #tpu.memory_space<vmem>>, vector<1x896xf32>
    %5 = vector.broadcast %4 : vector<1x896xf32> to vector<2x896xf32>
    %6 = arith.addf %3, %5 : vector<2x896xf32>
    %cst_5 = arith.constant 0.000000e+00 : f32
    %7 = vector.broadcast %cst_5 : f32 to vector<2x896xf32>
    %8 = arith.maximumf %6, %7 : vector<2x896xf32>
    %9 = arith.truncf %8 : vector<2x896xf32> to vector<2x896xbf16>
    %c0_6 = arith.constant 0 : index
    %c0_7 = arith.constant 0 : index
    %10 = vector.load %arg4[%c0_6, %c0_7] : memref<896x896xbf16, #tpu.memory_space<vmem>>, vector<896x896xbf16>
    %cst_8 = arith.constant dense<0.000000e+00> : vector<2x896xf32>
    %11 = tpu.matmul %9, %10, %cst_8 {dimension_numbers = #tpu.dot_dimension_numbers<[1], [0], [0], [1], [0, 0, 1, 1], [], []>} : vector<2x896xbf16>, vector<896x896xbf16>, vector<2x896xf32> -> vector<2x896xf32>
    %c0_9 = arith.constant 0 : index
    %c0_10 = arith.constant 0 : index
    %12 = vector.load %arg5[%c0_9, %c0_10] : memref<1x896xf32, #tpu.memory_space<vmem>>, vector<1x896xf32>
    %13 = vector.broadcast %12 : vector<1x896xf32> to vector<2x896xf32>
    %14 = arith.addf %11, %13 : vector<2x896xf32>
    %15 = math.absf %14 : vector<2x896xf32>
    %cst_11 = arith.constant 0.000000e+00 : f32
    %16 = vector.broadcast %cst_11 : f32 to vector<2x896xf32>
    %17 = arith.subf %16, %15 : vector<2x896xf32>
    %18 = math.exp %17 : vector<2x896xf32>
    %cst_12 = arith.constant 1.000000e+00 : f32
    %19 = vector.broadcast %cst_12 : f32 to vector<2x896xf32>
    %20 = arith.addf %19, %18 : vector<2x896xf32>
    %cst_13 = arith.constant 1.000000e+00 : f32
    %21 = vector.broadcast %cst_13 : f32 to vector<2x896xf32>
    %22 = arith.divf %21, %20 : vector<2x896xf32>
    %cst_14 = arith.constant 0.000000e+00 : f32
    %23 = vector.broadcast %cst_14 : f32 to vector<2x896xf32>
    %24 = arith.cmpf oge, %14, %23 : vector<2x896xf32>
    %25 = arith.mulf %18, %22 : vector<2x896xf32>
    %26 = arith.select %24, %22, %25 : vector<2x896xi1>, vector<2x896xf32>
    %c0_15 = arith.constant 0 : index
    %c0_16 = arith.constant 0 : index
    %27 = vector.load %arg6[%c0_15, %c0_16] : memref<2x896xf32, #tpu.memory_space<vmem>>, vector<2x896xf32>
    tpu.vector_store %arg6[%c0_15, %c0_16], %26 {strides = array<i32>} : memref<2x896xf32, #tpu.memory_space<vmem>>, vector<2x896xf32>,
    return
  }
  func.func @transform_0(%arg0: i32) -> (i32, i32) {
    %c0_i32 = arith.constant 0 : i32
    %c0_i32_0 = arith.constant 0 : i32
    return %arg0, %c0_i32 : i32, i32
  }
  func.func @transform_1(%arg0: i32) -> (i32, i32) {
    %c0_i32 = arith.constant 0 : i32
    %c0_i32_0 = arith.constant 0 : i32
    %c0_i32_1 = arith.constant 0 : i32
    return %c0_i32, %c0_i32_0 : i32, i32
  }
  func.func @transform_2(%arg0: i32) -> (i32, i32) {
    %c0_i32 = arith.constant 0 : i32
    %c0_i32_0 = arith.constant 0 : i32
    %c0_i32_1 = arith.constant 0 : i32
    return %c0_i32, %c0_i32_0 : i32, i32
  }
  func.func @transform_3(%arg0: i32) -> (i32, i32) {
    %c0_i32 = arith.constant 0 : i32
    %c0_i32_0 = arith.constant 0 : i32
    %c0_i32_1 = arith.constant 0 : i32
    return %c0_i32, %c0_i32_0 : i32, i32
  }
  func.func @transform_4(%arg0: i32) -> (i32, i32) {
    %c0_i32 = arith.constant 0 : i32
    %c0_i32_0 = arith.constant 0 : i32
    %c0_i32_1 = arith.constant 0 : i32
    return %c0_i32, %c0_i32_0 : i32, i32
  }
  func.func @transform_5(%arg0: i32) -> (i32, i32) {
    %c0_i32 = arith.constant 0 : i32
    %c0_i32_0 = arith.constant 0 : i32
    return %arg0, %c0_i32 : i32, i32
  }
}

</mosaic_0001>

<llo_original>
// kernel: tpu_custom_call.1
$region0: #{tpu_custom_call.1}
  #allocation0 [shape = 'u32[]', space=smem, size = 0x4, offset = 0x4, fixed_abs, tag = 'smem constant byte address 0x4 - core index']
  #allocation1 [shape = 'u32[144,128]{1,0:T(1,128)}', space=vmem, size = 0x12000, scoped, tag = 'internal scratch']
  %s0 = inlined_call_operand.hbm [shape: f32[2,8], index: 0, kind: input, shape index: {}]
  %s1 = inlined_call_operand.hbm [shape: bf16[8,896], index: 1, kind: input, shape index: {}]
  %s2 = inlined_call_operand.hbm [shape: f32[1,896], index: 2, kind: input, shape index: {}]
  %s3 = inlined_call_operand.hbm [shape: bf16[896,896], index: 3, kind: input, shape index: {}]
  %s4 = inlined_call_operand.hbm [shape: f32[1,896], index: 4, kind: input, shape index: {}]
  %s5 = inlined_call_operand.hbm [shape: f32[2,896], index: 5, kind: output, shape index: {}]
  %s6 = sld [smem:[#allocation0]]
  $region50: #{tpu_custom_call.1} parent=0
    _
  %s8 = ssub.s32 1, %s6
  %s9 = scalar_select 0, %s8, %s6
  $region1: #{tpu_custom_call.1} parent=0
    #allocation2 [shape = 'u8[1024]{0}', space=vmem, size = 0x400, scoped, tag = 'input window, operand 0, single buffered']
    #allocation3 [shape = 's32[1]{0}', space=sflag, size = 0x4, scoped, tag = 'scoped memory for tpu_custom_call.1']
    #allocation4 [shape = 's32[1]{0}', space=sflag, size = 0x4, scoped, tag = 'scoped memory for tpu_custom_call.1']
    #allocation5 [shape = 'u8[14336]{0}', space=vmem, size = 0x3800, scoped, tag = 'input window, operand 1, single buffered']
    #allocation6 [shape = 's32[1]{0}', space=sflag, size = 0x4, scoped, tag = 'scoped memory for tpu_custom_call.1']
    #allocation7 [shape = 'u8[3584]{0}', space=vmem, size = 0x1000, scoped, tag = 'input window, operand 2, single buffered']
    #allocation8 [shape = 'u8[1605632]{0}', space=vmem, size = 0x188000, scoped, tag = 'input window, operand 3, single buffered']
    #allocation9 [shape = 's32[1]{0}', space=sflag, size = 0x4, scoped, tag = 'scoped memory for tpu_custom_call.1']
    #allocation10 [shape = 'u8[3584]{0}', space=vmem, size = 0x1000, scoped, tag = 'input window, operand 4, single buffered']
    #allocation11 [shape = 'u8[7168]{0}', space=vmem, size = 0x1c00, scoped, tag = 'output window, operand 0, single buffered']
    %10 = vsyncpa [#allocation3], 0
    %11 = vsyncpa [#allocation6], 0
    %12 = vsyncpa [#allocation9], 0
    %13 = vsyncpa [#allocation4], 0
    // Predicated region
    $region2: #{tpu_custom_call.1} parent=1 // pred_check
      _
    $region3: #{tpu_custom_call.1} parent=1 // pred_check_branch
      %15 = sbr.rel (0) target = $region5
    $region4: #{tpu_custom_call.1} parent=1 // pred_region
      %s17 = ssub.s32 32, 32
      %18 = vsyncadd [#allocation3], %s17
      %s20 = sshll.u32 [#allocation2], 4
      %s21 = int_to_ptr.vmem [resolvable:$true] %s20
      %23 = dma.hbm_to_vmem [thread:$0]  %s0, 32, %s21, [#allocation3]
    $region5: #{tpu_custom_call.1} parent=1 // pred_fallthru
      _
    // Predicated region
    $region6: #{tpu_custom_call.1} parent=1 // pred_check
      _
    $region7: #{tpu_custom_call.1} parent=1 // pred_check_branch
      %25 = sbr.rel (0) target = $region9
    $region8: #{tpu_custom_call.1} parent=1 // pred_region
      %s27 = ssub.s32 448, 448
      %28 = vsyncadd [#allocation6], %s27
      %s30 = sshll.u32 [#allocation5], 4
      %s31 = int_to_ptr.vmem [resolvable:$true] %s30
      %33 = dma.hbm_to_vmem [thread:$0]  %s1, 448, %s31, [#allocation6]
    $region9: #{tpu_custom_call.1} parent=1 // pred_fallthru
      _
    // Predicated region
    $region10: #{tpu_custom_call.1} parent=1 // pred_check
      _
    $region11: #{tpu_custom_call.1} parent=1 // pred_check_branch
      %35 = sbr.rel (0) target = $region13
    $region12: #{tpu_custom_call.1} parent=1 // pred_region
      %s37 = ssub.s32 112, 112
      %38 = vsyncadd [#allocation6], %s37
      %s40 = sshll.u32 [#allocation7], 4
      %s41 = int_to_ptr.vmem [resolvable:$true] %s40
      %43 = dma.hbm_to_vmem [thread:$0]  %s2, 112, %s41, [#allocation6]
    $region13: #{tpu_custom_call.1} parent=1 // pred_fallthru
      _
    // Predicated region
    $region14: #{tpu_custom_call.1} parent=1 // pred_check
      _
    $region15: #{tpu_custom_call.1} parent=1 // pred_check_branch
      %45 = sbr.rel (0) target = $region17
    $region16: #{tpu_custom_call.1} parent=1 // pred_region
      %s47 = ssub.s32 50176, 50176
      %48 = vsyncadd [#allocation9], %s47
      %s49 = sshll.u32 [#allocation8], 4
      %s50 = int_to_ptr.vmem [resolvable:$true] %s49
      %55 = dma.hbm_to_vmem [thread:$0]  %s3, 50176, %s50, [#allocation9], 448, 448, 28
    $region17: #{tpu_custom_call.1} parent=1 // pred_fallthru
      _
    // Predicated region
    $region18: #{tpu_custom_call.1} parent=1 // pred_check
      _
    $region19: #{tpu_custom_call.1} parent=1 // pred_check_branch
      %57 = sbr.rel (0) target = $region21
    $region20: #{tpu_custom_call.1} parent=1 // pred_region
      %s59 = ssub.s32 112, 112
      %60 = vsyncadd [#allocation9], %s59
      %s62 = sshll.u32 [#allocation10], 4
      %s63 = int_to_ptr.vmem [resolvable:$true] %s62
      %65 = dma.hbm_to_vmem [thread:$0]  %s4, 112, %s63, [#allocation9]
    $region21: #{tpu_custom_call.1} parent=1 // pred_fallthru
      _
    // Predicated region
    $region22: #{tpu_custom_call.1} parent=1 // pred_check
      _
    $region23: #{tpu_custom_call.1} parent=1 // pred_check_branch
      %67 = sbr.rel (0) target = $region25
    $region24: #{tpu_custom_call.1} parent=1 // pred_region
      %68 = dma.done [#allocation3], 32
    $region25: #{tpu_custom_call.1} parent=1 // pred_fallthru
      _
    // Predicated region
    $region26: #{tpu_custom_call.1} parent=1 // pred_check
      _
    $region27: #{tpu_custom_call.1} parent=1 // pred_check_branch
      %70 = sbr.rel (0) target = $region29
    $region28: #{tpu_custom_call.1} parent=1 // pred_region
      %71 = dma.done [#allocation6], 448
    $region29: #{tpu_custom_call.1} parent=1 // pred_fallthru
      _
    // Predicated region
    $region30: #{tpu_custom_call.1} parent=1 // pred_check
      _
    $region31: #{tpu_custom_call.1} parent=1 // pred_check_branch
      %73 = sbr.rel (0) target = $region33
    $region32: #{tpu_custom_call.1} parent=1 // pred_region
      %74 = dma.done [#allocation6], 112
    $region33: #{tpu_custom_call.1} parent=1 // pred_fallthru
      _
    // Predicated region
    $region34: #{tpu_custom_call.1} parent=1 // pred_check
      _
    $region35: #{tpu_custom_call.1} parent=1 // pred_check_branch
      %76 = sbr.rel (0) target = $region37
    $region36: #{tpu_custom_call.1} parent=1 // pred_region
      %77 = dma.done [#allocation9], 50176
    $region37: #{tpu_custom_call.1} parent=1 // pred_fallthru
      _
    // Predicated region
    $region38: #{tpu_custom_call.1} parent=1 // pred_check
      _
    $region39: #{tpu_custom_call.1} parent=1 // pred_check_branch
      %79 = sbr.rel (0) target = $region41
    $region40: #{tpu_custom_call.1} parent=1 // pred_region
      %80 = dma.done [#allocation9], 112
    $region41: #{tpu_custom_call.1} parent=1 // pred_fallthru
      _
    %v82 = vld [vmem:[#allocation2] sm:$0x3]
    %v83 = vpack.c.bf16 %v82, %v82
    %v84 = vld [vmem:[#allocation5] sm:$0xff]
    %v85 = vld [vmem:[#allocation5 + $0x8] sm:$0xff]
    %v86 = vld [vmem:[#allocation5 + $0x10] sm:$0xff]
    %v87 = vld [vmem:[#allocation5 + $0x18] sm:$0xf]
    %v88 = vld [vmem:[#allocation7] sm:$0xff]
    %v90 = vlaneseq
    %v91 = vshrl.u32 %v90, 7
    %v92 = vsub.s32 0, %v91
    %v93 = vrot.slane %v88, %v92
    %v94 = vlaneseq
    %v95 = vshrl.u32 %v94, 7
    %v96 = vsub.s32 1, %v95
    %v97 = vrot.slane %v88, %v96
    %v98 = vlaneseq
    %v99 = vshrl.u32 %v98, 7
    %v100 = vsub.s32 2, %v99
    %v101 = vrot.slane %v88, %v100
    %v102 = vlaneseq
    %v103 = vshrl.u32 %v102, 7
    %v104 = vsub.s32 3, %v103
    %v105 = vrot.slane %v88, %v104
    %v106 = vlaneseq
    %v107 = vshrl.u32 %v106, 7
    %v108 = vsub.s32 4, %v107
    %v109 = vrot.slane %v88, %v108
    %v110 = vlaneseq
    %v111 = vshrl.u32 %v110, 7
    %v112 = vsub.s32 5, %v111
    %v113 = vrot.slane %v88, %v112
    %v114 = vlaneseq
    %v115 = vshrl.u32 %v114, 7
    %v116 = vsub.s32 6, %v115
    %v117 = vrot.slane %v88, %v116
    %v129 = vunpack.c.l.b16 %v84
    %v130 = vunpack.c.h.b16 %v84
    %v131 = vunpack.c.l.b16 %v85
    %v132 = vunpack.c.h.b16 %v85
    %v133 = vunpack.c.l.b16 %v86
    %v134 = vunpack.c.h.b16 %v86
    %v135 = vunpack.c.l.b16 %v87
    %v136 = vpack.c.b16 %v129, %v129
    %v137 = vpack.c.b16 %v130, %v130
    %v138 = vpack.c.b16 %v131, %v131
    %v139 = vpack.c.b16 %v132, %v132
    %v140 = vpack.c.b16 %v133, %v133
    %v141 = vpack.c.b16 %v134, %v134
    %v142 = vpack.c.b16 %v135, %v135
    %vm143 = vcmask 64512
    %v145 = vsel %vm143, %v83, 0
    %vm147 = vcmask 1043456
    %v149 = vsel %vm147, %v136, 0
    %v152 = vsel %vm147, %v137, 0
    %v155 = vsel %vm147, %v138, 0
    %v158 = vsel %vm147, %v139, 0
    %v161 = vsel %vm147, %v140, 0
    %v164 = vsel %vm147, %v141, 0
    %v167 = vsel %vm147, %v142, 0
    %169 = vmatprep.subr.bf16.mxu0 %v152
    %170 = vmatpush1.bf16.msra.mxu0 %v149
    %171 = vmatprep.subr.bf16.mxu0 0
    %172 = vmatpush1.bf16.msra.mxu0 0
    %173 = vmatprep.subr.bf16.mxu0 0
    %174 = vmatpush1.bf16.msra.mxu0 0
    %175 = vmatprep.subr.bf16.mxu0 0
    %176 = vmatpush1.bf16.msra.mxu0 0
    %177 = vmatprep.subr.bf16.mxu0 0
    %178 = vmatpush1.bf16.msra.mxu0 0
    %179 = vmatprep.subr.bf16.mxu0 0
    %180 = vmatpush1.bf16.msra.mxu0 0
    %181 = vmatprep.subr.bf16.mxu0 0
    %182 = vmatpush1.bf16.msra.mxu0 0
    %183 = vmatprep.subr.bf16.mxu0 0
    %184 = vmatpush1.bf16.msra.mxu0 0
    %185 = vmatprep.subr.bf16.mxu0 0
    %186 = vmatpush1.bf16.msra.mxu0 0
    %187 = vmatprep.subr.bf16.mxu0 0
    %188 = vmatpush1.bf16.msra.mxu0 0
    %189 = vmatprep.subr.bf16.mxu0 0
    %190 = vmatpush1.bf16.msra.mxu0 0
    %191 = vmatprep.subr.bf16.mxu0 0
    %192 = vmatpush1.bf16.msra.mxu0 0
    %193 = vmatprep.subr.bf16.mxu0 0
    %194 = vmatpush1.bf16.msra.mxu0 0
    %195 = vmatprep.subr.bf16.mxu0 0
    %196 = vmatpush1.bf16.msra.mxu0 0
    %197 = vmatprep.subr.bf16.mxu0 0
    %198 = vmatpush1.bf16.msra.mxu0 0
    %199 = vmatprep.subr.bf16.mxu0 0
    %200 = vmatpush1.bf16.msra.mxu0 0
    %201 = vmatprep.mubr.bf16.mxu0 0
    %202 = vmatmul.mubr.bf16.gmra.mrb[0].mxu0 %v145
    %v203 = vpop.f32.mrb[0].mxu0
    %v204 = vadd.f32 %v93, %v203
    %v205 = vpop.f32.mrb[0].mxu0
    %v206 = vadd.f32 %v97, %v205
    %v207 = vpop.f32.mrb[0].mxu0
    %v208 = vpop.f32.mrb[0].mxu0
    %209 = vdwg.mxu0
    %210 = vmatprep.subr.bf16.mxu0 %v158
    %211 = vmatpush1.bf16.msra.mxu0 %v155
    %212 = vmatprep.subr.bf16.mxu0 0
    %213 = vmatpush1.bf16.msra.mxu0 0
    %214 = vmatprep.subr.bf16.mxu0 0
    %215 = vmatpush1.bf16.msra.mxu0 0
    %216 = vmatprep.subr.bf16.mxu0 0
    %217 = vmatpush1.bf16.msra.mxu0 0
    %218 = vmatprep.subr.bf16.mxu0 0
    %219 = vmatpush1.bf16.msra.mxu0 0
    %220 = vmatprep.subr.bf16.mxu0 0
    %221 = vmatpush1.bf16.msra.mxu0 0
    %222 = vmatprep.subr.bf16.mxu0 0
    %223 = vmatpush1.bf16.msra.mxu0 0
    %224 = vmatprep.subr.bf16.mxu0 0
    %225 = vmatpush1.bf16.msra.mxu0 0
    %226 = vmatprep.subr.bf16.mxu0 0
    %227 = vmatpush1.bf16.msra.mxu0 0
    %228 = vmatprep.subr.bf16.mxu0 0
    %229 = vmatpush1.bf16.msra.mxu0 0
    %230 = vmatprep.subr.bf16.mxu0 0
    %231 = vmatpush1.bf16.msra.mxu0 0
    %232 = vmatprep.subr.bf16.mxu0 0
    %233 = vmatpush1.bf16.msra.mxu0 0
    %234 = vmatprep.subr.bf16.mxu0 0
    %235 = vmatpush1.bf16.msra.mxu0 0
    %236 = vmatprep.subr.bf16.mxu0 0
    %237 = vmatpush1.bf16.msra.mxu0 0
    %238 = vmatprep.subr.bf16.mxu0 0
    %239 = vmatpush1.bf16.msra.mxu0 0
    %240 = vmatprep.subr.bf16.mxu0 0
    %241 = vmatpush1.bf16.msra.mxu0 0
    %242 = vmatprep.mubr.bf16.mxu0 0
    %243 = vmatmul.mubr.bf16.gmra.mrb[0].mxu0 %v145
    %v244 = vpop.f32.mrb[0].mxu0
    %v245 = vadd.f32 %v101, %v244
    %v246 = vpop.f32.mrb[0].mxu0
    %v247 = vadd.f32 %v105, %v246
    %v248 = vpop.f32.mrb[0].mxu0
    %v249 = vpop.f32.mrb[0].mxu0
    %250 = vdwg.mxu0
    %251 = vmatprep.subr.bf16.mxu0 %v164
    %252 = vmatpush1.bf16.msra.mxu0 %v161
    %253 = vmatprep.subr.bf16.mxu0 0
    %254 = vmatpush1.bf16.msra.mxu0 0
    %255 = vmatprep.subr.bf16.mxu0 0
    %256 = vmatpush1.bf16.msra.mxu0 0
    %257 = vmatprep.subr.bf16.mxu0 0
    %258 = vmatpush1.bf16.msra.mxu0 0
    %259 = vmatprep.subr.bf16.mxu0 0
    %260 = vmatpush1.bf16.msra.mxu0 0
    %261 = vmatprep.subr.bf16.mxu0 0
    %262 = vmatpush1.bf16.msra.mxu0 0
    %263 = vmatprep.subr.bf16.mxu0 0
    %264 = vmatpush1.bf16.msra.mxu0 0
    %265 = vmatprep.subr.bf16.mxu0 0
    %266 = vmatpush1.bf16.msra.mxu0 0
    %267 = vmatprep.subr.bf16.mxu0 0
    %268 = vmatpush1.bf16.msra.mxu0 0
    %269 = vmatprep.subr.bf16.mxu0 0
    %270 = vmatpush1.bf16.msra.mxu0 0
    %271 = vmatprep.subr.bf16.mxu0 0
    %272 = vmatpush1.bf16.msra.mxu0 0
    %273 = vmatprep.subr.bf16.mxu0 0
    %274 = vmatpush1.bf16.msra.mxu0 0
    %275 = vmatprep.subr.bf16.mxu0 0
    %276 = vmatpush1.bf16.msra.mxu0 0
    %277 = vmatprep.subr.bf16.mxu0 0
    %278 = vmatpush1.bf16.msra.mxu0 0
    %279 = vmatprep.subr.bf16.mxu0 0
    %280 = vmatpush1.bf16.msra.mxu0 0
    %281 = vmatprep.subr.bf16.mxu0 0
    %282 = vmatpush1.bf16.msra.mxu0 0
    %283 = vmatprep.mubr.bf16.mxu0 0
    %284 = vmatmul.mubr.bf16.gmra.mrb[0].mxu0 %v145
    %v285 = vpop.f32.mrb[0].mxu0
    %v286 = vadd.f32 %v109, %v285
    %v287 = vpop.f32.mrb[0].mxu0
    %v288 = vadd.f32 %v113, %v287
    %v289 = vpop.f32.mrb[0].mxu0
    %v290 = vpop.f32.mrb[0].mxu0
    %291 = vdwg.mxu0
    %292 = vmatprep.subr.bf16.mxu0 0
    %293 = vmatpush1.bf16.msra.mxu0 %v167
    %294 = vmatprep.subr.bf16.mxu0 0
    %295 = vmatpush1.bf16.msra.mxu0 0
    %296 = vmatprep.subr.bf16.mxu0 0
    %297 = vmatpush1.bf16.msra.mxu0 0
    %298 = vmatprep.subr.bf16.mxu0 0
    %299 = vmatpush1.bf16.msra.mxu0 0
    %300 = vmatprep.subr.bf16.mxu0 0
    %301 = vmatpush1.bf16.msra.mxu0 0
    %302 = vmatprep.subr.bf16.mxu0 0
    %303 = vmatpush1.bf16.msra.mxu0 0
    %304 = vmatprep.subr.bf16.mxu0 0
    %305 = vmatpush1.bf16.msra.mxu0 0
    %306 = vmatprep.subr.bf16.mxu0 0
    %307 = vmatpush1.bf16.msra.mxu0 0
    %308 = vmatprep.subr.bf16.mxu0 0
    %309 = vmatpush1.bf16.msra.mxu0 0
    %310 = vmatprep.subr.bf16.mxu0 0
    %311 = vmatpush1.bf16.msra.mxu0 0
    %312 = vmatprep.subr.bf16.mxu0 0
    %313 = vmatpush1.bf16.msra.mxu0 0
    %314 = vmatprep.subr.bf16.mxu0 0
    %315 = vmatpush1.bf16.msra.mxu0 0
    %316 = vmatprep.subr.bf16.mxu0 0
    %317 = vmatpush1.bf16.msra.mxu0 0
    %318 = vmatprep.subr.bf16.mxu0 0
    %319 = vmatpush1.bf16.msra.mxu0 0
    %320 = vmatprep.subr.bf16.mxu0 0
    %321 = vmatpush1.bf16.msra.mxu0 0
    %322 = vmatprep.subr.bf16.mxu0 0
    %323 = vmatpush1.bf16.msra.mxu0 0
    %324 = vmatprep.mubr.bf16.mxu0 0
    %325 = vmatmul.mubr.bf16.gmra.mrb[0].mxu0 %v145
    %v326 = vpop.f32.mrb[0].mxu0
    %v327 = vadd.f32 %v117, %v326
    %v328 = vpop.f32.mrb[0].mxu0
    %v329 = vpop.f32.mrb[0].mxu0
    %v330 = vpop.f32.mrb[0].mxu0
    %331 = vdwg.mxu0
    %v332 = vmax.f32 %v204, 0.0
    %v333 = vmax.f32 %v206, 0.0
    %v334 = vmax.f32 %v245, 0.0
    %v335 = vmax.f32 %v247, 0.0
    %v336 = vmax.f32 %v286, 0.0
    %v337 = vmax.f32 %v288, 0.0
    %v338 = vmax.f32 %v327, 0.0
    %v339 = vpack.c.bf16 %v332, %v332
    %v340 = vpack.c.bf16 %v333, %v333
    %v341 = vpack.c.bf16 %v334, %v334
    %v342 = vpack.c.bf16 %v335, %v335
    %v343 = vpack.c.bf16 %v336, %v336
    %v344 = vpack.c.bf16 %v337, %v337
    %v345 = vpack.c.bf16 %v338, %v338
    %v346 = vld [vmem:[#allocation8] sm:$0xff]
    %v347 = vld [vmem:[#allocation8 + $0x8] sm:$0xff]
    %v348 = vld [vmem:[#allocation8 + $0x10] sm:$0xff]
    %v349 = vld [vmem:[#allocation8 + $0x18] sm:$0xf]
    %v350 = vld [vmem:[#allocation8 + $0x1c] sm:$0xff]
    %v351 = vld [vmem:[#allocation8 + $0x24] sm:$0xff]
    %v352 = vld [vmem:[#allocation8 + $0x2c] sm:$0xff]
    %v353 = vld [vmem:[#allocation8 + $0x34] sm:$0xf]
    %v354 = vld [vmem:[#allocation8 + $0x38] sm:$0xff]
    %v355 = vld [vmem:[#allocation8 + $0x40] sm:$0xff]
    %v356 = vld [vmem:[#allocation8 + $0x48] sm:$0xff]
    %v357 = vld [vmem:[#allocation8 + $0x50] sm:$0xf]
    %v358 = vld [vmem:[#allocation8 + $0x54] sm:$0xff]
    %v359 = vld [vmem:[#allocation8 + $0x5c] sm:$0xff]
    %v360 = vld [vmem:[#allocation8 + $0x64] sm:$0xff]
    %v361 = vld [vmem:[#allocation8 + $0x6c] sm:$0xf]
    %v362 = vld [vmem:[#allocation8 + $0x70] sm:$0xff]
    %v363 = vld [vmem:[#allocation8 + $0x78] sm:$0xff]
    %v364 = vld [vmem:[#allocation8 + $0x80] sm:$0xff]
    %v365 = vld [vmem:[#allocation8 + $0x88] sm:$0xf]
    %v366 = vld [vmem:[#allocation8 + $0x8c] sm:$0xff]
    %v367 = vld [vmem:[#allocation8 + $0x94] sm:$0xff]
    %v368 = vld [vmem:[#allocation8 + $0x9c] sm:$0xff]
    %v369 = vld [vmem:[#allocation8 + $0xa4] sm:$0xf]
    %v370 = vld [vmem:[#allocation8 + $0xa8] sm:$0xff]
    %v371 = vld [vmem:[#allocation8 + $0xb0] sm:$0xff]
    %v372 = vld [vmem:[#allocation8 + $0xb8] sm:$0xff]
    %v373 = vld [vmem:[#allocation8 + $0xc0] sm:$0xf]
    %v374 = vld [vmem:[#allocation8 + $0xc4] sm:$0xff]
    %v375 = vld [vmem:[#allocation8 + $0xcc] sm:$0xff]
    %v376 = vld [vmem:[#allocation8 + $0xd4] sm:$0xff]
    %v377 = vld [vmem:[#allocation8 + $0xdc] sm:$0xf]
    %v378 = vld [vmem:[#allocation8 + $0xe0] sm:$0xff]
    %v379 = vld [vmem:[#allocation8 + $0xe8] sm:$0xff]
    %v380 = vld [vmem:[#allocation8 + $0xf0] sm:$0xff]
    %v381 = vld [vmem:[#allocation8 + $0xf8] sm:$0xf]
    %v382 = vld [vmem:[#allocation8 + $0xfc] sm:$0xff]
    %v383 = vld [vmem:[#allocation8 + $0x104] sm:$0xff]
    %v384 = vld [vmem:[#allocation8 + $0x10c] sm:$0xff]
    %v385 = vld [vmem:[#allocation8 + $0x114] sm:$0xf]
    %v386 = vld [vmem:[#allocation8 + $0x118] sm:$0xff]
    %v387 = vld [vmem:[#allocation8 + $0x120] sm:$0xff]
    %v388 = vld [vmem:[#allocation8 + $0x128] sm:$0xff]
    %v389 = vld [vmem:[#allocation8 + $0x130] sm:$0xf]
    %v390 = vld [vmem:[#allocation8 + $0x134] sm:$0xff]
    %v391 = vld [vmem:[#allocation8 + $0x13c] sm:$0xff]
    %v392 = vld [vmem:[#allocation8 + $0x144] sm:$0xff]
    %v393 = vld [vmem:[#allocation8 + $0x14c] sm:$0xf]
    %v394 = vld [vmem:[#allocation8 + $0x150] sm:$0xff]
    %v395 = vld [vmem:[#allocation8 + $0x158] sm:$0xff]
    %v396 = vld [vmem:[#allocation8 + $0x160] sm:$0xff]
    %v397 = vld [vmem:[#allocation8 + $0x168] sm:$0xf]
    %v398 = vld [vmem:[#allocation8 + $0x16c] sm:$0xff]
    %v399 = vld [vmem:[#allocation8 + $0x174] sm:$0xff]
    %v400 = vld [vmem:[#allocation8 + $0x17c] sm:$0xff]
    %v401 = vld [vmem:[#allocation8 + $0x184] sm:$0xf]
    %v402 = vld [vmem:[#allocation8 + $0x188] sm:$0xff]
    %v403 = vld [vmem:[#allocation8 + $0x190] sm:$0xff]
    %v404 = vld [vmem:[#allocation8 + $0x198] sm:$0xff]
    %v405 = vld [vmem:[#allocation8 + $0x1a0] sm:$0xf]
    %v406 = vld [vmem:[#allocation8 + $0x1a4] sm:$0xff]
    %v407 = vld [vmem:[#allocation8 + $0x1ac] sm:$0xff]
    %v408 = vld [vmem:[#allocation8 + $0x1b4] sm:$0xff]
    %v409 = vld [vmem:[#allocation8 + $0x1bc] sm:$0xf]
    %v410 = vld [vmem:[#allocation8 + $0x1c0] sm:$0xff]
    %v411 = vld [vmem:[#allocation8 + $0x1c8] sm:$0xff]
    %v412 = vld [vmem:[#allocation8 + $0x1d0] sm:$0xff]
    %v413 = vld [vmem:[#allocation8 + $0x1d8] sm:$0xf]
    %v414 = vld [vmem:[#allocation8 + $0x1dc] sm:$0xff]
    %v415 = vld [vmem:[#allocation8 + $0x1e4] sm:$0xff]
    %v416 = vld [vmem:[#allocation8 + $0x1ec] sm:$0xff]
    %v417 = vld [vmem:[#allocation8 + $0x1f4] sm:$0xf]
    %v418 = vld [vmem:[#allocation8 + $0x1f8] sm:$0xff]
    %v419 = vld [vmem:[#allocation8 + $0x200] sm:$0xff]
    %v420 = vld [vmem:[#allocation8 + $0x208] sm:$0xff]
    %v421 = vld [vmem:[#allocation8 + $0x210] sm:$0xf]
    %v422 = vld [vmem:[#allocation8 + $0x214] sm:$0xff]
    %v423 = vld [vmem:[#allocation8 + $0x21c] sm:$0xff]
    %v424 = vld [vmem:[#allocation8 + $0x224] sm:$0xff]
    %v425 = vld [vmem:[#allocation8 + $0x22c] sm:$0xf]
    %v426 = vld [vmem:[#allocation8 + $0x230] sm:$0xff]
    %v427 = vld [vmem:[#allocation8 + $0x238] sm:$0xff]
    %v428 = vld [vmem:[#allocation8 + $0x240] sm:$0xff]
    %v429 = vld [vmem:[#allocation8 + $0x248] sm:$0xf]
    %v430 = vld [vmem:[#allocation8 + $0x24c] sm:$0xff]
    %v431 = vld [vmem:[#allocation8 + $0x254] sm:$0xff]
    %v432 = vld [vmem:[#allocation8 + $0x25c] sm:$0xff]
    %v433 = vld [vmem:[#allocation8 + $0x264] sm:$0xf]
    %v434 = vld [vmem:[#allocation8 + $0x268] sm:$0xff]
    %v435 = vld [vmem:[#allocation8 + $0x270] sm:$0xff]
    %v436 = vld [vmem:[#allocation8 + $0x278] sm:$0xff]
    %v437 = vld [vmem:[#allocation8 + $0x280] sm:$0xf]
    %v438 = vld [vmem:[#allocation8 + $0x284] sm:$0xff]
    %v439 = vld [vmem:[#allocation8 + $0x28c] sm:$0xff]
    %v440 = vld [vmem:[#allocation8 + $0x294] sm:$0xff]
    %v441 = vld [vmem:[#allocation8 + $0x29c] sm:$0xf]
    %v442 = vld [vmem:[#allocation8 + $0x2a0] sm:$0xff]
    %v443 = vld [vmem:[#allocation8 + $0x2a8] sm:$0xff]
    %v444 = vld [vmem:[#allocation8 + $0x2b0] sm:$0xff]
    %v445 = vld [vmem:[#allocation8 + $0x2b8] sm:$0xf]
    %v446 = vld [vmem:[#allocation8 + $0x2bc] sm:$0xff]
    %v447 = vld [vmem:[#allocation8 + $0x2c4] sm:$0xff]
    %v448 = vld [vmem:[#allocation8 + $0x2cc] sm:$0xff]
    %v449 = vld [vmem:[#allocation8 + $0x2d4] sm:$0xf]
    %v450 = vld [vmem:[#allocation8 + $0x2d8] sm:$0xff]
    %v451 = vld [vmem:[#allocation8 + $0x2e0] sm:$0xff]
    %v452 = vld [vmem:[#allocation8 + $0x2e8] sm:$0xff]
    %v453 = vld [vmem:[#allocation8 + $0x2f0] sm:$0xf]
    %v454 = vld [vmem:[#allocation8 + $0x2f4] sm:$0xff]
    %v455 = vld [vmem:[#allocation8 + $0x2fc] sm:$0xff]
    %v456 = vld [vmem:[#allocation8 + $0x304] sm:$0xff]
    %v457 = vld [vmem:[#allocation8 + $0x30c] sm:$0xf]
    %v458 = vld [vmem:[#allocation8 + $0x310] sm:$0xff]
    %v459 = vld [vmem:[#allocation8 + $0x318] sm:$0xff]
    %v460 = vld [vmem:[#allocation8 + $0x320] sm:$0xff]
    %v461 = vld [vmem:[#allocation8 + $0x328] sm:$0xf]
    %v462 = vld [vmem:[#allocation8 + $0x32c] sm:$0xff]
    %v463 = vld [vmem:[#allocation8 + $0x334] sm:$0xff]
    %v464 = vld [vmem:[#allocation8 + $0x33c] sm:$0xff]
    %v465 = vld [vmem:[#allocation8 + $0x344] sm:$0xf]
    %v466 = vld [vmem:[#allocation8 + $0x348] sm:$0xff]
    %v467 = vld [vmem:[#allocation8 + $0x350] sm:$0xff]
    %v468 = vld [vmem:[#allocation8 + $0x358] sm:$0xff]
    %v469 = vld [vmem:[#allocation8 + $0x360] sm:$0xf]
    %v470 = vld [vmem:[#allocation8 + $0x364] sm:$0xff]
    %v471 = vld [vmem:[#allocation8 + $0x36c] sm:$0xff]
    %v472 = vld [vmem:[#allocation8 + $0x374] sm:$0xff]
    %v473 = vld [vmem:[#allocation8 + $0x37c] sm:$0xf]
    %v474 = vld [vmem:[#allocation8 + $0x380] sm:$0xff]
    %v475 = vld [vmem:[#allocation8 + $0x388] sm:$0xff]
    %v476 = vld [vmem:[#allocation8 + $0x390] sm:$0xff]
    %v477 = vld [vmem:[#allocation8 + $0x398] sm:$0xf]
    %v478 = vld [vmem:[#allocation8 + $0x39c] sm:$0xff]
    %v479 = vld [vmem:[#allocation8 + $0x3a4] sm:$0xff]
    %v480 = vld [vmem:[#allocation8 + $0x3ac] sm:$0xff]
    %v481 = vld [vmem:[#allocation8 + $0x3b4] sm:$0xf]
    %v482 = vld [vmem:[#allocation8 + $0x3b8] sm:$0xff]
    %v483 = vld [vmem:[#allocation8 + $0x3c0] sm:$0xff]
    %v484 = vld [vmem:[#allocation8 + $0x3c8] sm:$0xff]
    %v485 = vld [vmem:[#allocation8 + $0x3d0] sm:$0xf]
    %v486 = vld [vmem:[#allocation8 + $0x3d4] sm:$0xff]
    %v487 = vld [vmem:[#allocation8 + $0x3dc] sm:$0xff]
    %v488 = vld [vmem:[#allocation8 + $0x3e4] sm:$0xff]
    %v489 = vld [vmem:[#allocation8 + $0x3ec] sm:$0xf]
    %v490 = vld [vmem:[#allocation8 + $0x3f0] sm:$0xff]
    %v491 = vld [vmem:[#allocation8 + $0x3f8] sm:$0xff]
    %v492 = vld [vmem:[#allocation8 + $0x400] sm:$0xff]
    %v493 = vld [vmem:[#allocation8 + $0x408] sm:$0xf]
    %v494 = vld [vmem:[#allocation8 + $0x40c] sm:$0xff]
    %v495 = vld [vmem:[#allocation8 + $0x414] sm:$0xff]
    %v496 = vld [vmem:[#allocation8 + $0x41c] sm:$0xff]
    %v497 = vld [vmem:[#allocation8 + $0x424] sm:$0xf]
    %v498 = vld [vmem:[#allocation8 + $0x428] sm:$0xff]
    %v499 = vld [vmem:[#allocation8 + $0x430] sm:$0xff]
    %v500 = vld [vmem:[#allocation8 + $0x438] sm:$0xff]
    %v501 = vld [vmem:[#allocation8 + $0x440] sm:$0xf]
    %v502 = vld [vmem:[#allocation8 + $0x444] sm:$0xff]
    %v503 = vld [vmem:[#allocation8 + $0x44c] sm:$0xff]
    %v504 = vld [vmem:[#allocation8 + $0x454] sm:$0xff]
    %v505 = vld [vmem:[#allocation8 + $0x45c] sm:$0xf]
    %v506 = vld [vmem:[#allocation8 + $0x460] sm:$0xff]
    %v507 = vld [vmem:[#allocation8 + $0x468] sm:$0xff]
    %v508 = vld [vmem:[#allocation8 + $0x470] sm:$0xff]
    %v509 = vld [vmem:[#allocation8 + $0x478] sm:$0xf]
    %v510 = vld [vmem:[#allocation8 + $0x47c] sm:$0xff]
    %v511 = vld [vmem:[#allocation8 + $0x484] sm:$0xff]
    %v512 = vld [vmem:[#allocation8 + $0x48c] sm:$0xff]
    %v513 = vld [vmem:[#allocation8 + $0x494] sm:$0xf]
    %v514 = vld [vmem:[#allocation8 + $0x498] sm:$0xff]
    %v515 = vld [vmem:[#allocation8 + $0x4a0] sm:$0xff]
    %v516 = vld [vmem:[#allocation8 + $0x4a8] sm:$0xff]
    %v517 = vld [vmem:[#allocation8 + $0x4b0] sm:$0xf]
    %v518 = vld [vmem:[#allocation8 + $0x4b4] sm:$0xff]
    %v519 = vld [vmem:[#allocation8 + $0x4bc] sm:$0xff]
    %v520 = vld [vmem:[#allocation8 + $0x4c4] sm:$0xff]
    %v521 = vld [vmem:[#allocation8 + $0x4cc] sm:$0xf]
    %v522 = vld [vmem:[#allocation8 + $0x4d0] sm:$0xff]
    %v523 = vld [vmem:[#allocation8 + $0x4d8] sm:$0xff]
    %v524 = vld [vmem:[#allocation8 + $0x4e0] sm:$0xff]
    %v525 = vld [vmem:[#allocation8 + $0x4e8] sm:$0xf]
    %v526 = vld [vmem:[#allocation8 + $0x4ec] sm:$0xff]
    %v527 = vld [vmem:[#allocation8 + $0x4f4] sm:$0xff]
    %v528 = vld [vmem:[#allocation8 + $0x4fc] sm:$0xff]
    %v529 = vld [vmem:[#allocation8 + $0x504] sm:$0xf]
    %v530 = vld [vmem:[#allocation8 + $0x508] sm:$0xff]
    %v531 = vld [vmem:[#allocation8 + $0x510] sm:$0xff]
    %v532 = vld [vmem:[#allocation8 + $0x518] sm:$0xff]
    %v533 = vld [vmem:[#allocation8 + $0x520] sm:$0xf]
    %v534 = vld [vmem:[#allocation8 + $0x524] sm:$0xff]
    %v535 = vld [vmem:[#allocation8 + $0x52c] sm:$0xff]
    %v536 = vld [vmem:[#allocation8 + $0x534] sm:$0xff]
    %v537 = vld [vmem:[#allocation8 + $0x53c] sm:$0xf]
    %v538 = vld [vmem:[#allocation8 + $0x540] sm:$0xff]
    %v539 = vld [vmem:[#allocation8 + $0x548] sm:$0xff]
    %v540 = vld [vmem:[#allocation8 + $0x550] sm:$0xff]
    %v541 = vld [vmem:[#allocation8 + $0x558] sm:$0xf]
    %v542 = vld [vmem:[#allocation8 + $0x55c] sm:$0xff]
    %v543 = vld [vmem:[#allocation8 + $0x564] sm:$0xff]
    %v544 = vld [vmem:[#allocation8 + $0x56c] sm:$0xff]
    %v545 = vld [vmem:[#allocation8 + $0x574] sm:$0xf]
    %v546 = vld [vmem:[#allocation8 + $0x578] sm:$0xff]
    %v547 = vld [vmem:[#allocation8 + $0x580] sm:$0xff]
    %v548 = vld [vmem:[#allocation8 + $0x588] sm:$0xff]
    %v549 = vld [vmem:[#allocation8 + $0x590] sm:$0xf]
    %v550 = vld [vmem:[#allocation8 + $0x594] sm:$0xff]
    %v551 = vld [vmem:[#allocation8 + $0x59c] sm:$0xff]
    %v552 = vld [vmem:[#allocation8 + $0x5a4] sm:$0xff]
    %v553 = vld [vmem:[#allocation8 + $0x5ac] sm:$0xf]
    %v554 = vld [vmem:[#allocation8 + $0x5b0] sm:$0xff]
    %v555 = vld [vmem:[#allocation8 + $0x5b8] sm:$0xff]
    %v556 = vld [vmem:[#allocation8 + $0x5c0] sm:$0xff]
    %v557 = vld [vmem:[#allocation8 + $0x5c8] sm:$0xf]
    %v558 = vld [vmem:[#allocation8 + $0x5cc] sm:$0xff]
    %v559 = vld [vmem:[#allocation8 + $0x5d4] sm:$0xff]
    %v560 = vld [vmem:[#allocation8 + $0x5dc] sm:$0xff]
    %v561 = vld [vmem:[#allocation8 + $0x5e4] sm:$0xf]
    %v562 = vld [vmem:[#allocation8 + $0x5e8] sm:$0xff]
    %v563 = vld [vmem:[#allocation8 + $0x5f0] sm:$0xff]
    %v564 = vld [vmem:[#allocation8 + $0x5f8] sm:$0xff]
    %v565 = vld [vmem:[#allocation8 + $0x600] sm:$0xf]
    %v566 = vld [vmem:[#allocation8 + $0x604] sm:$0xff]
    %v567 = vld [vmem:[#allocation8 + $0x60c] sm:$0xff]
    %v568 = vld [vmem:[#allocation8 + $0x614] sm:$0xff]
    %v569 = vld [vmem:[#allocation8 + $0x61c] sm:$0xf]
    %v570 = vld [vmem:[#allocation8 + $0x620] sm:$0xff]
    %v571 = vld [vmem:[#allocation8 + $0x628] sm:$0xff]
    %v572 = vld [vmem:[#allocation8 + $0x630] sm:$0xff]
    %v573 = vld [vmem:[#allocation8 + $0x638] sm:$0xf]
    %v574 = vld [vmem:[#allocation8 + $0x63c] sm:$0xff]
    %v575 = vld [vmem:[#allocation8 + $0x644] sm:$0xff]
    %v576 = vld [vmem:[#allocation8 + $0x64c] sm:$0xff]
    %v577 = vld [vmem:[#allocation8 + $0x654] sm:$0xf]
    %v578 = vld [vmem:[#allocation8 + $0x658] sm:$0xff]
    %v579 = vld [vmem:[#allocation8 + $0x660] sm:$0xff]
    %v580 = vld [vmem:[#allocation8 + $0x668] sm:$0xff]
    %v581 = vld [vmem:[#allocation8 + $0x670] sm:$0xf]
    %v582 = vld [vmem:[#allocation8 + $0x674] sm:$0xff]
    %v583 = vld [vmem:[#allocation8 + $0x67c] sm:$0xff]
    %v584 = vld [vmem:[#allocation8 + $0x684] sm:$0xff]
    %v585 = vld [vmem:[#allocation8 + $0x68c] sm:$0xf]
    %v586 = vld [vmem:[#allocation8 + $0x690] sm:$0xff]
    %v587 = vld [vmem:[#allocation8 + $0x698] sm:$0xff]
    %v588 = vld [vmem:[#allocation8 + $0x6a0] sm:$0xff]
    %v589 = vld [vmem:[#allocation8 + $0x6a8] sm:$0xf]
    %v590 = vld [vmem:[#allocation8 + $0x6ac] sm:$0xff]
    %v591 = vld [vmem:[#allocation8 + $0x6b4] sm:$0xff]
    %v592 = vld [vmem:[#allocation8 + $0x6bc] sm:$0xff]
    %v593 = vld [vmem:[#allocation8 + $0x6c4] sm:$0xf]
    %v594 = vld [vmem:[#allocation8 + $0x6c8] sm:$0xff]
    %v595 = vld [vmem:[#allocation8 + $0x6d0] sm:$0xff]
    %v596 = vld [vmem:[#allocation8 + $0x6d8] sm:$0xff]
    %v597 = vld [vmem:[#allocation8 + $0x6e0] sm:$0xf]
    %v598 = vld [vmem:[#allocation8 + $0x6e4] sm:$0xff]
    %v599 = vld [vmem:[#allocation8 + $0x6ec] sm:$0xff]
    %v600 = vld [vmem:[#allocation8 + $0x6f4] sm:$0xff]
    %v601 = vld [vmem:[#allocation8 + $0x6fc] sm:$0xf]
    %v602 = vld [vmem:[#allocation8 + $0x700] sm:$0xff]
    %v603 = vld [vmem:[#allocation8 + $0x708] sm:$0xff]
    %v604 = vld [vmem:[#allocation8 + $0x710] sm:$0xff]
    %v605 = vld [vmem:[#allocation8 + $0x718] sm:$0xf]
    %v606 = vld [vmem:[#allocation8 + $0x71c] sm:$0xff]
    %v607 = vld [vmem:[#allocation8 + $0x724] sm:$0xff]
    %v608 = vld [vmem:[#allocation8 + $0x72c] sm:$0xff]
    %v609 = vld [vmem:[#allocation8 + $0x734] sm:$0xf]
    %v610 = vld [vmem:[#allocation8 + $0x738] sm:$0xff]
    %v611 = vld [vmem:[#allocation8 + $0x740] sm:$0xff]
    %v612 = vld [vmem:[#allocation8 + $0x748] sm:$0xff]
    %v613 = vld [vmem:[#allocation8 + $0x750] sm:$0xf]
    %v614 = vld [vmem:[#allocation8 + $0x754] sm:$0xff]
    %v615 = vld [vmem:[#allocation8 + $0x75c] sm:$0xff]
    %v616 = vld [vmem:[#allocation8 + $0x764] sm:$0xff]
    %v617 = vld [vmem:[#allocation8 + $0x76c] sm:$0xf]
    %v618 = vld [vmem:[#allocation8 + $0x770] sm:$0xff]
    %v619 = vld [vmem:[#allocation8 + $0x778] sm:$0xff]
    %v620 = vld [vmem:[#allocation8 + $0x780] sm:$0xff]
    %v621 = vld [vmem:[#allocation8 + $0x788] sm:$0xf]
    %v622 = vld [vmem:[#allocation8 + $0x78c] sm:$0xff]
    %v623 = vld [vmem:[#allocation8 + $0x794] sm:$0xff]
    %v624 = vld [vmem:[#allocation8 + $0x79c] sm:$0xff]
    %v625 = vld [vmem:[#allocation8 + $0x7a4] sm:$0xf]
    %v626 = vld [vmem:[#allocation8 + $0x7a8] sm:$0xff]
    %v627 = vld [vmem:[#allocation8 + $0x7b0] sm:$0xff]
    %v628 = vld [vmem:[#allocation8 + $0x7b8] sm:$0xff]
    %v629 = vld [vmem:[#allocation8 + $0x7c0] sm:$0xf]
    %v630 = vld [vmem:[#allocation8 + $0x7c4] sm:$0xff]
    %v631 = vld [vmem:[#allocation8 + $0x7cc] sm:$0xff]
    %v632 = vld [vmem:[#allocation8 + $0x7d4] sm:$0xff]
    %v633 = vld [vmem:[#allocation8 + $0x7dc] sm:$0xf]
    %v634 = vld [vmem:[#allocation8 + $0x7e0] sm:$0xff]
    %v635 = vld [vmem:[#allocation8 + $0x7e8] sm:$0xff]
    %v636 = vld [vmem:[#allocation8 + $0x7f0] sm:$0xff]
    %v637 = vld [vmem:[#allocation8 + $0x7f8] sm:$0xf]
    %v638 = vld [vmem:[#allocation8 + $0x7fc] sm:$0xff]
    %v639 = vld [vmem:[#allocation8 + $0x804] sm:$0xff]
    %v640 = vld [vmem:[#allocation8 + $0x80c] sm:$0xff]
    %v641 = vld [vmem:[#allocation8 + $0x814] sm:$0xf]
    %v642 = vld [vmem:[#allocation8 + $0x818] sm:$0xff]
    %v643 = vld [vmem:[#allocation8 + $0x820] sm:$0xff]
    %v644 = vld [vmem:[#allocation8 + $0x828] sm:$0xff]
    %v645 = vld [vmem:[#allocation8 + $0x830] sm:$0xf]
    %v646 = vld [vmem:[#allocation8 + $0x834] sm:$0xff]
    %v647 = vld [vmem:[#allocation8 + $0x83c] sm:$0xff]
    %v648 = vld [vmem:[#allocation8 + $0x844] sm:$0xff]
    %v649 = vld [vmem:[#allocation8 + $0x84c] sm:$0xf]
    %v650 = vld [vmem:[#allocation8 + $0x850] sm:$0xff]
    %v651 = vld [vmem:[#allocation8 + $0x858] sm:$0xff]
    %v652 = vld [vmem:[#allocation8 + $0x860] sm:$0xff]
    %v653 = vld [vmem:[#allocation8 + $0x868] sm:$0xf]
    %v654 = vld [vmem:[#allocation8 + $0x86c] sm:$0xff]
    %v655 = vld [vmem:[#allocation8 + $0x874] sm:$0xff]
    %v656 = vld [vmem:[#allocation8 + $0x87c] sm:$0xff]
    %v657 = vld [vmem:[#allocation8 + $0x884] sm:$0xf]
    %v658 = vld [vmem:[#allocation8 + $0x888] sm:$0xff]
    %v659 = vld [vmem:[#allocation8 + $0x890] sm:$0xff]
    %v660 = vld [vmem:[#allocation8 + $0x898] sm:$0xff]
    %v661 = vld [vmem:[#allocation8 + $0x8a0] sm:$0xf]
    %v662 = vld [vmem:[#allocation8 + $0x8a4] sm:$0xff]
    %v663 = vld [vmem:[#allocation8 + $0x8ac] sm:$0xff]
    %v664 = vld [vmem:[#allocation8 + $0x8b4] sm:$0xff]
    %v665 = vld [vmem:[#allocation8 + $0x8bc] sm:$0xf]
    %v666 = vld [vmem:[#allocation8 + $0x8c0] sm:$0xff]
    %v667 = vld [vmem:[#allocation8 + $0x8c8] sm:$0xff]
    %v668 = vld [vmem:[#allocation8 + $0x8d0] sm:$0xff]
    %v669 = vld [vmem:[#allocation8 + $0x8d8] sm:$0xf]
    %v670 = vld [vmem:[#allocation8 + $0x8dc] sm:$0xff]
    %v671 = vld [vmem:[#allocation8 + $0x8e4] sm:$0xff]
    %v672 = vld [vmem:[#allocation8 + $0x8ec] sm:$0xff]
    %v673 = vld [vmem:[#allocation8 + $0x8f4] sm:$0xf]
    %v674 = vld [vmem:[#allocation8 + $0x8f8] sm:$0xff]
    %v675 = vld [vmem:[#allocation8 + $0x900] sm:$0xff]
    %v676 = vld [vmem:[#allocation8 + $0x908] sm:$0xff]
    %v677 = vld [vmem:[#allocation8 + $0x910] sm:$0xf]
    %v678 = vld [vmem:[#allocation8 + $0x914] sm:$0xff]
    %v679 = vld [vmem:[#allocation8 + $0x91c] sm:$0xff]
    %v680 = vld [vmem:[#allocation8 + $0x924] sm:$0xff]
    %v681 = vld [vmem:[#allocation8 + $0x92c] sm:$0xf]
    %v682 = vld [vmem:[#allocation8 + $0x930] sm:$0xff]
    %v683 = vld [vmem:[#allocation8 + $0x938] sm:$0xff]
    %v684 = vld [vmem:[#allocation8 + $0x940] sm:$0xff]
    %v685 = vld [vmem:[#allocation8 + $0x948] sm:$0xf]
    %v686 = vld [vmem:[#allocation8 + $0x94c] sm:$0xff]
    %v687 = vld [vmem:[#allocation8 + $0x954] sm:$0xff]
    %v688 = vld [vmem:[#allocation8 + $0x95c] sm:$0xff]
    %v689 = vld [vmem:[#allocation8 + $0x964] sm:$0xf]
    %v690 = vld [vmem:[#allocation8 + $0x968] sm:$0xff]
    %v691 = vld [vmem:[#allocation8 + $0x970] sm:$0xff]
    %v692 = vld [vmem:[#allocation8 + $0x978] sm:$0xff]
    %v693 = vld [vmem:[#allocation8 + $0x980] sm:$0xf]
    %v694 = vld [vmem:[#allocation8 + $0x984] sm:$0xff]
    %v695 = vld [vmem:[#allocation8 + $0x98c] sm:$0xff]
    %v696 = vld [vmem:[#allocation8 + $0x994] sm:$0xff]
    %v697 = vld [vmem:[#allocation8 + $0x99c] sm:$0xf]
    %v698 = vld [vmem:[#allocation8 + $0x9a0] sm:$0xff]
    %v699 = vld [vmem:[#allocation8 + $0x9a8] sm:$0xff]
    %v700 = vld [vmem:[#allocation8 + $0x9b0] sm:$0xff]
    %v701 = vld [vmem:[#allocation8 + $0x9b8] sm:$0xf]
    %v702 = vld [vmem:[#allocation8 + $0x9bc] sm:$0xff]
    %v703 = vld [vmem:[#allocation8 + $0x9c4] sm:$0xff]
    %v704 = vld [vmem:[#allocation8 + $0x9cc] sm:$0xff]
    %v705 = vld [vmem:[#allocation8 + $0x9d4] sm:$0xf]
    %v706 = vld [vmem:[#allocation8 + $0x9d8] sm:$0xff]
    %v707 = vld [vmem:[#allocation8 + $0x9e0] sm:$0xff]
    %v708 = vld [vmem:[#allocation8 + $0x9e8] sm:$0xff]
    %v709 = vld [vmem:[#allocation8 + $0x9f0] sm:$0xf]
    %v710 = vld [vmem:[#allocation8 + $0x9f4] sm:$0xff]
    %v711 = vld [vmem:[#allocation8 + $0x9fc] sm:$0xff]
    %v712 = vld [vmem:[#allocation8 + $0xa04] sm:$0xff]
    %v713 = vld [vmem:[#allocation8 + $0xa0c] sm:$0xf]
    %v714 = vld [vmem:[#allocation8 + $0xa10] sm:$0xff]
    %v715 = vld [vmem:[#allocation8 + $0xa18] sm:$0xff]
    %v716 = vld [vmem:[#allocation8 + $0xa20] sm:$0xff]
    %v717 = vld [vmem:[#allocation8 + $0xa28] sm:$0xf]
    %v718 = vld [vmem:[#allocation8 + $0xa2c] sm:$0xff]
    %v719 = vld [vmem:[#allocation8 + $0xa34] sm:$0xff]
    %v720 = vld [vmem:[#allocation8 + $0xa3c] sm:$0xff]
    %v721 = vld [vmem:[#allocation8 + $0xa44] sm:$0xf]
    %v722 = vld [vmem:[#allocation8 + $0xa48] sm:$0xff]
    %v723 = vld [vmem:[#allocation8 + $0xa50] sm:$0xff]
    %v724 = vld [vmem:[#allocation8 + $0xa58] sm:$0xff]
    %v725 = vld [vmem:[#allocation8 + $0xa60] sm:$0xf]
    %v726 = vld [vmem:[#allocation8 + $0xa64] sm:$0xff]
    %v727 = vld [vmem:[#allocation8 + $0xa6c] sm:$0xff]
    %v728 = vld [vmem:[#allocation8 + $0xa74] sm:$0xff]
    %v729 = vld [vmem:[#allocation8 + $0xa7c] sm:$0xf]
    %v730 = vld [vmem:[#allocation8 + $0xa80] sm:$0xff]
    %v731 = vld [vmem:[#allocation8 + $0xa88] sm:$0xff]
    %v732 = vld [vmem:[#allocation8 + $0xa90] sm:$0xff]
    %v733 = vld [vmem:[#allocation8 + $0xa98] sm:$0xf]
    %v734 = vld [vmem:[#allocation8 + $0xa9c] sm:$0xff]
    %v735 = vld [vmem:[#allocation8 + $0xaa4] sm:$0xff]
    %v736 = vld [vmem:[#allocation8 + $0xaac] sm:$0xff]
    %v737 = vld [vmem:[#allocation8 + $0xab4] sm:$0xf]
    %v738 = vld [vmem:[#allocation8 + $0xab8] sm:$0xff]
    %v739 = vld [vmem:[#allocation8 + $0xac0] sm:$0xff]
    %v740 = vld [vmem:[#allocation8 + $0xac8] sm:$0xff]
    %v741 = vld [vmem:[#allocation8 + $0xad0] sm:$0xf]
    %v742 = vld [vmem:[#allocation8 + $0xad4] sm:$0xff]
    %v743 = vld [vmem:[#allocation8 + $0xadc] sm:$0xff]
    %v744 = vld [vmem:[#allocation8 + $0xae4] sm:$0xff]
    %v745 = vld [vmem:[#allocation8 + $0xaec] sm:$0xf]
    %v746 = vld [vmem:[#allocation8 + $0xaf0] sm:$0xff]
    %v747 = vld [vmem:[#allocation8 + $0xaf8] sm:$0xff]
    %v748 = vld [vmem:[#allocation8 + $0xb00] sm:$0xff]
    %v749 = vld [vmem:[#allocation8 + $0xb08] sm:$0xf]
    %v750 = vld [vmem:[#allocation8 + $0xb0c] sm:$0xff]
    %v751 = vld [vmem:[#allocation8 + $0xb14] sm:$0xff]
    %v752 = vld [vmem:[#allocation8 + $0xb1c] sm:$0xff]
    %v753 = vld [vmem:[#allocation8 + $0xb24] sm:$0xf]
    %v754 = vld [vmem:[#allocation8 + $0xb28] sm:$0xff]
    %v755 = vld [vmem:[#allocation8 + $0xb30] sm:$0xff]
    %v756 = vld [vmem:[#allocation8 + $0xb38] sm:$0xff]
    %v757 = vld [vmem:[#allocation8 + $0xb40] sm:$0xf]
    %v758 = vld [vmem:[#allocation8 + $0xb44] sm:$0xff]
    %v759 = vld [vmem:[#allocation8 + $0xb4c] sm:$0xff]
    %v760 = vld [vmem:[#allocation8 + $0xb54] sm:$0xff]
    %v761 = vld [vmem:[#allocation8 + $0xb5c] sm:$0xf]
    %v762 = vld [vmem:[#allocation8 + $0xb60] sm:$0xff]
    %v763 = vld [vmem:[#allocation8 + $0xb68] sm:$0xff]
    %v764 = vld [vmem:[#allocation8 + $0xb70] sm:$0xff]
    %v765 = vld [vmem:[#allocation8 + $0xb78] sm:$0xf]
    %v766 = vld [vmem:[#allocation8 + $0xb7c] sm:$0xff]
    %v767 = vld [vmem:[#allocation8 + $0xb84] sm:$0xff]
    %v768 = vld [vmem:[#allocation8 + $0xb8c] sm:$0xff]
    %v769 = vld [vmem:[#allocation8 + $0xb94] sm:$0xf]
    %v770 = vld [vmem:[#allocation8 + $0xb98] sm:$0xff]
    %v771 = vld [vmem:[#allocation8 + $0xba0] sm:$0xff]
    %v772 = vld [vmem:[#allocation8 + $0xba8] sm:$0xff]
    %v773 = vld [vmem:[#allocation8 + $0xbb0] sm:$0xf]
    %v774 = vld [vmem:[#allocation8 + $0xbb4] sm:$0xff]
    %v775 = vld [vmem:[#allocation8 + $0xbbc] sm:$0xff]
    %v776 = vld [vmem:[#allocation8 + $0xbc4] sm:$0xff]
    %v777 = vld [vmem:[#allocation8 + $0xbcc] sm:$0xf]
    %v778 = vld [vmem:[#allocation8 + $0xbd0] sm:$0xff]
    %v779 = vld [vmem:[#allocation8 + $0xbd8] sm:$0xff]
    %v780 = vld [vmem:[#allocation8 + $0xbe0] sm:$0xff]
    %v781 = vld [vmem:[#allocation8 + $0xbe8] sm:$0xf]
    %v782 = vld [vmem:[#allocation8 + $0xbec] sm:$0xff]
    %v783 = vld [vmem:[#allocation8 + $0xbf4] sm:$0xff]
    %v784 = vld [vmem:[#allocation8 + $0xbfc] sm:$0xff]
    %v785 = vld [vmem:[#allocation8 + $0xc04] sm:$0xf]
    %v786 = vld [vmem:[#allocation8 + $0xc08] sm:$0xff]
    %v787 = vld [vmem:[#allocation8 + $0xc10] sm:$0xff]
    %v788 = vld [vmem:[#allocation8 + $0xc18] sm:$0xff]
    %v789 = vld [vmem:[#allocation8 + $0xc20] sm:$0xf]
    %v790 = vld [vmem:[#allocation8 + $0xc24] sm:$0xff]
    %v791 = vld [vmem:[#allocation8 + $0xc2c] sm:$0xff]
    %v792 = vld [vmem:[#allocation8 + $0xc34] sm:$0xff]
    %v793 = vld [vmem:[#allocation8 + $0xc3c] sm:$0xf]
    %v794 = vld [vmem:[#allocation10] sm:$0xff]
    %v796 = vlaneseq
    %v797 = vshrl.u32 %v796, 7
    %v798 = vsub.s32 0, %v797
    %v799 = vrot.slane %v794, %v798
    %v800 = vlaneseq
    %v801 = vshrl.u32 %v800, 7
    %v802 = vsub.s32 1, %v801
    %v803 = vrot.slane %v794, %v802
    %v804 = vlaneseq
    %v805 = vshrl.u32 %v804, 7
    %v806 = vsub.s32 2, %v805
    %v807 = vrot.slane %v794, %v806
    %v808 = vlaneseq
    %v809 = vshrl.u32 %v808, 7
    %v810 = vsub.s32 3, %v809
    %v811 = vrot.slane %v794, %v810
    %v812 = vlaneseq
    %v813 = vshrl.u32 %v812, 7
    %v814 = vsub.s32 4, %v813
    %v815 = vrot.slane %v794, %v814
    %v816 = vlaneseq
    %v817 = vshrl.u32 %v816, 7
    %v818 = vsub.s32 5, %v817
    %v819 = vrot.slane %v794, %v818
    %v820 = vlaneseq
    %v821 = vshrl.u32 %v820, 7
    %v822 = vsub.s32 6, %v821
    %v823 = vrot.slane %v794, %v822
    %v1279 = vunpack.c.l.b16 %v346
    %v1280 = vunpack.c.h.b16 %v346
    %v1281 = vunpack.c.l.b16 %v347
    %v1282 = vunpack.c.h.b16 %v347
    %v1283 = vunpack.c.l.b16 %v348
    %v1284 = vunpack.c.h.b16 %v348
    %v1285 = vunpack.c.l.b16 %v349
    %v1286 = vunpack.c.l.b16 %v350
    %v1287 = vunpack.c.h.b16 %v350
    %v1288 = vunpack.c.l.b16 %v351
    %v1289 = vunpack.c.h.b16 %v351
    %v1290 = vunpack.c.l.b16 %v352
    %v1291 = vunpack.c.h.b16 %v352
    %v1292 = vunpack.c.l.b16 %v353
    %v1293 = vunpack.c.l.b16 %v354
    %v1294 = vunpack.c.h.b16 %v354
    %v1295 = vunpack.c.l.b16 %v355
    %v1296 = vunpack.c.h.b16 %v355
    %v1297 = vunpack.c.l.b16 %v356
    %v1298 = vunpack.c.h.b16 %v356
    %v1299 = vunpack.c.l.b16 %v357
    %v1300 = vunpack.c.l.b16 %v358
    %v1301 = vunpack.c.h.b16 %v358
    %v1302 = vunpack.c.l.b16 %v359
    %v1303 = vunpack.c.h.b16 %v359
    %v1304 = vunpack.c.l.b16 %v360
    %v1305 = vunpack.c.h.b16 %v360
    %v1306 = vunpack.c.l.b16 %v361
    %v1307 = vunpack.c.l.b16 %v362
    %v1308 = vunpack.c.h.b16 %v362
    %v1309 = vunpack.c.l.b16 %v363
    %v1310 = vunpack.c.h.b16 %v363
    %v1311 = vunpack.c.l.b16 %v364
    %v1312 = vunpack.c.h.b16 %v364
    %v1313 = vunpack.c.l.b16 %v365
    %v1314 = vunpack.c.l.b16 %v366
    %v1315 = vunpack.c.h.b16 %v366
    %v1316 = vunpack.c.l.b16 %v367
    %v1317 = vunpack.c.h.b16 %v367
    %v1318 = vunpack.c.l.b16 %v368
    %v1319 = vunpack.c.h.b16 %v368
    %v1320 = vunpack.c.l.b16 %v369
    %v1321 = vunpack.c.l.b16 %v370
    %v1322 = vunpack.c.h.b16 %v370
    %v1323 = vunpack.c.l.b16 %v371
    %v1324 = vunpack.c.h.b16 %v371
    %v1325 = vunpack.c.l.b16 %v372
    %v1326 = vunpack.c.h.b16 %v372
    %v1327 = vunpack.c.l.b16 %v373
    %v1328 = vunpack.c.l.b16 %v374
    %v1329 = vunpack.c.h.b16 %v374
    %v1330 = vunpack.c.l.b16 %v375
    %v1331 = vunpack.c.h.b16 %v375
    %v1332 = vunpack.c.l.b16 %v376
    %v1333 = vunpack.c.h.b16 %v376
    %v1334 = vunpack.c.l.b16 %v377
    %v1335 = vunpack.c.l.b16 %v378
    %v1336 = vunpack.c.h.b16 %v378
    %v1337 = vunpack.c.l.b16 %v379
    %v1338 = vunpack.c.h.b16 %v379
    %v1339 = vunpack.c.l.b16 %v380
    %v1340 = vunpack.c.h.b16 %v380
    %v1341 = vunpack.c.l.b16 %v381
    %v1342 = vunpack.c.l.b16 %v382
    %v1343 = vunpack.c.h.b16 %v382
    %v1344 = vunpack.c.l.b16 %v383
    %v1345 = vunpack.c.h.b16 %v383
    %v1346 = vunpack.c.l.b16 %v384
    %v1347 = vunpack.c.h.b16 %v384
    %v1348 = vunpack.c.l.b16 %v385
    %v1349 = vunpack.c.l.b16 %v386
    %v1350 = vunpack.c.h.b16 %v386
    %v1351 = vunpack.c.l.b16 %v387
    %v1352 = vunpack.c.h.b16 %v387
    %v1353 = vunpack.c.l.b16 %v388
    %v1354 = vunpack.c.h.b16 %v388
    %v1355 = vunpack.c.l.b16 %v389
    %v1356 = vunpack.c.l.b16 %v390
    %v1357 = vunpack.c.h.b16 %v390
    %v1358 = vunpack.c.l.b16 %v391
    %v1359 = vunpack.c.h.b16 %v391
    %v1360 = vunpack.c.l.b16 %v392
    %v1361 = vunpack.c.h.b16 %v392
    %v1362 = vunpack.c.l.b16 %v393
    %v1363 = vunpack.c.l.b16 %v394
    %v1364 = vunpack.c.h.b16 %v394
    %v1365 = vunpack.c.l.b16 %v395
    %v1366 = vunpack.c.h.b16 %v395
    %v1367 = vunpack.c.l.b16 %v396
    %v1368 = vunpack.c.h.b16 %v396
    %v1369 = vunpack.c.l.b16 %v397
    %v1370 = vunpack.c.l.b16 %v398
    %v1371 = vunpack.c.h.b16 %v398
    %v1372 = vunpack.c.l.b16 %v399
    %v1373 = vunpack.c.h.b16 %v399
    %v1374 = vunpack.c.l.b16 %v400
    %v1375 = vunpack.c.h.b16 %v400
    %v1376 = vunpack.c.l.b16 %v401
    %v1377 = vunpack.c.l.b16 %v402
    %v1378 = vunpack.c.h.b16 %v402
    %v1379 = vunpack.c.l.b16 %v403
    %v1380 = vunpack.c.h.b16 %v403
    %v1381 = vunpack.c.l.b16 %v404
    %v1382 = vunpack.c.h.b16 %v404
    %v1383 = vunpack.c.l.b16 %v405
    %v1384 = vunpack.c.l.b16 %v406
    %v1385 = vunpack.c.h.b16 %v406
    %v1386 = vunpack.c.l.b16 %v407
    %v1387 = vunpack.c.h.b16 %v407
    %v1388 = vunpack.c.l.b16 %v408
    %v1389 = vunpack.c.h.b16 %v408
    %v1390 = vunpack.c.l.b16 %v409
    %v1391 = vunpack.c.l.b16 %v410
    %v1392 = vunpack.c.h.b16 %v410
    %v1393 = vunpack.c.l.b16 %v411
    %v1394 = vunpack.c.h.b16 %v411
    %v1395 = vunpack.c.l.b16 %v412
    %v1396 = vunpack.c.h.b16 %v412
    %v1397 = vunpack.c.l.b16 %v413
    %v1398 = vunpack.c.l.b16 %v414
    %v1399 = vunpack.c.h.b16 %v414
    %v1400 = vunpack.c.l.b16 %v415
    %v1401 = vunpack.c.h.b16 %v415
    %v1402 = vunpack.c.l.b16 %v416
    %v1403 = vunpack.c.h.b16 %v416
    %v1404 = vunpack.c.l.b16 %v417
    %v1405 = vunpack.c.l.b16 %v418
    %v1406 = vunpack.c.h.b16 %v418
    %v1407 = vunpack.c.l.b16 %v419
    %v1408 = vunpack.c.h.b16 %v419
    %v1409 = vunpack.c.l.b16 %v420
    %v1410 = vunpack.c.h.b16 %v420
    %v1411 = vunpack.c.l.b16 %v421
    %v1412 = vunpack.c.l.b16 %v422
    %v1413 = vunpack.c.h.b16 %v422
    %v1414 = vunpack.c.l.b16 %v423
    %v1415 = vunpack.c.h.b16 %v423
    %v1416 = vunpack.c.l.b16 %v424
    %v1417 = vunpack.c.h.b16 %v424
    %v1418 = vunpack.c.l.b16 %v425
    %v1419 = vunpack.c.l.b16 %v426
    %v1420 = vunpack.c.h.b16 %v426
    %v1421 = vunpack.c.l.b16 %v427
    %v1422 = vunpack.c.h.b16 %v427
    %v1423 = vunpack.c.l.b16 %v428
    %v1424 = vunpack.c.h.b16 %v428
    %v1425 = vunpack.c.l.b16 %v429
    %v1426 = vunpack.c.l.b16 %v430
    %v1427 = vunpack.c.h.b16 %v430
    %v1428 = vunpack.c.l.b16 %v431
    %v1429 = vunpack.c.h.b16 %v431
    %v1430 = vunpack.c.l.b16 %v432
    %v1431 = vunpack.c.h.b16 %v432
    %v1432 = vunpack.c.l.b16 %v433
    %v1433 = vunpack.c.l.b16 %v434
    %v1434 = vunpack.c.h.b16 %v434
    %v1435 = vunpack.c.l.b16 %v435
    %v1436 = vunpack.c.h.b16 %v435
    %v1437 = vunpack.c.l.b16 %v436
    %v1438 = vunpack.c.h.b16 %v436
    %v1439 = vunpack.c.l.b16 %v437
    %v1440 = vunpack.c.l.b16 %v438
    %v1441 = vunpack.c.h.b16 %v438
    %v1442 = vunpack.c.l.b16 %v439
    %v1443 = vunpack.c.h.b16 %v439
    %v1444 = vunpack.c.l.b16 %v440
    %v1445 = vunpack.c.h.b16 %v440
    %v1446 = vunpack.c.l.b16 %v441
    %v1447 = vunpack.c.l.b16 %v442
    %v1448 = vunpack.c.h.b16 %v442
    %v1449 = vunpack.c.l.b16 %v443
    %v1450 = vunpack.c.h.b16 %v443
    %v1451 = vunpack.c.l.b16 %v444
    %v1452 = vunpack.c.h.b16 %v444
    %v1453 = vunpack.c.l.b16 %v445
    %v1454 = vunpack.c.l.b16 %v446
    %v1455 = vunpack.c.h.b16 %v446
    %v1456 = vunpack.c.l.b16 %v447
    %v1457 = vunpack.c.h.b16 %v447
    %v1458 = vunpack.c.l.b16 %v448
    %v1459 = vunpack.c.h.b16 %v448
    %v1460 = vunpack.c.l.b16 %v449
    %v1461 = vunpack.c.l.b16 %v450
    %v1462 = vunpack.c.h.b16 %v450
    %v1463 = vunpack.c.l.b16 %v451
    %v1464 = vunpack.c.h.b16 %v451
    %v1465 = vunpack.c.l.b16 %v452
    %v1466 = vunpack.c.h.b16 %v452
    %v1467 = vunpack.c.l.b16 %v453
    %v1468 = vunpack.c.l.b16 %v454
    %v1469 = vunpack.c.h.b16 %v454
    %v1470 = vunpack.c.l.b16 %v455
    %v1471 = vunpack.c.h.b16 %v455
    %v1472 = vunpack.c.l.b16 %v456
    %v1473 = vunpack.c.h.b16 %v456
    %v1474 = vunpack.c.l.b16 %v457
    %v1475 = vunpack.c.l.b16 %v458
    %v1476 = vunpack.c.h.b16 %v458
    %v1477 = vunpack.c.l.b16 %v459
    %v1478 = vunpack.c.h.b16 %v459
    %v1479 = vunpack.c.l.b16 %v460
    %v1480 = vunpack.c.h.b16 %v460
    %v1481 = vunpack.c.l.b16 %v461
    %v1482 = vunpack.c.l.b16 %v462
    %v1483 = vunpack.c.h.b16 %v462
    %v1484 = vunpack.c.l.b16 %v463
    %v1485 = vunpack.c.h.b16 %v463
    %v1486 = vunpack.c.l.b16 %v464
    %v1487 = vunpack.c.h.b16 %v464
    %v1488 = vunpack.c.l.b16 %v465
    %v1489 = vunpack.c.l.b16 %v466
    %v1490 = vunpack.c.h.b16 %v466
    %v1491 = vunpack.c.l.b16 %v467
    %v1492 = vunpack.c.h.b16 %v467
    %v1493 = vunpack.c.l.b16 %v468
    %v1494 = vunpack.c.h.b16 %v468
    %v1495 = vunpack.c.l.b16 %v469
    %v1496 = vunpack.c.l.b16 %v470
    %v1497 = vunpack.c.h.b16 %v470
    %v1498 = vunpack.c.l.b16 %v471
    %v1499 = vunpack.c.h.b16 %v471
    %v1500 = vunpack.c.l.b16 %v472
    %v1501 = vunpack.c.h.b16 %v472
    %v1502 = vunpack.c.l.b16 %v473
    %v1503 = vunpack.c.l.b16 %v474
    %v1504 = vunpack.c.h.b16 %v474
    %v1505 = vunpack.c.l.b16 %v475
    %v1506 = vunpack.c.h.b16 %v475
    %v1507 = vunpack.c.l.b16 %v476
    %v1508 = vunpack.c.h.b16 %v476
    %v1509 = vunpack.c.l.b16 %v477
    %v1510 = vunpack.c.l.b16 %v478
    %v1511 = vunpack.c.h.b16 %v478
    %v1512 = vunpack.c.l.b16 %v479
    %v1513 = vunpack.c.h.b16 %v479
    %v1514 = vunpack.c.l.b16 %v480
    %v1515 = vunpack.c.h.b16 %v480
    %v1516 = vunpack.c.l.b16 %v481
    %v1517 = vunpack.c.l.b16 %v482
    %v1518 = vunpack.c.h.b16 %v482
    %v1519 = vunpack.c.l.b16 %v483
    %v1520 = vunpack.c.h.b16 %v483
    %v1521 = vunpack.c.l.b16 %v484
    %v1522 = vunpack.c.h.b16 %v484
    %v1523 = vunpack.c.l.b16 %v485
    %v1524 = vunpack.c.l.b16 %v486
    %v1525 = vunpack.c.h.b16 %v486
    %v1526 = vunpack.c.l.b16 %v487
    %v1527 = vunpack.c.h.b16 %v487
    %v1528 = vunpack.c.l.b16 %v488
    %v1529 = vunpack.c.h.b16 %v488
    %v1530 = vunpack.c.l.b16 %v489
    %v1531 = vunpack.c.l.b16 %v490
    %v1532 = vunpack.c.h.b16 %v490
    %v1533 = vunpack.c.l.b16 %v491
    %v1534 = vunpack.c.h.b16 %v491
    %v1535 = vunpack.c.l.b16 %v492
    %v1536 = vunpack.c.h.b16 %v492
    %v1537 = vunpack.c.l.b16 %v493
    %v1538 = vunpack.c.l.b16 %v494
    %v1539 = vunpack.c.h.b16 %v494
    %v1540 = vunpack.c.l.b16 %v495
    %v1541 = vunpack.c.h.b16 %v495
    %v1542 = vunpack.c.l.b16 %v496
    %v1543 = vunpack.c.h.b16 %v496
    %v1544 = vunpack.c.l.b16 %v497
    %v1545 = vunpack.c.l.b16 %v498
    %v1546 = vunpack.c.h.b16 %v498
    %v1547 = vunpack.c.l.b16 %v499
    %v1548 = vunpack.c.h.b16 %v499
    %v1549 = vunpack.c.l.b16 %v500
    %v1550 = vunpack.c.h.b16 %v500
    %v1551 = vunpack.c.l.b16 %v501
    %v1552 = vunpack.c.l.b16 %v502
    %v1553 = vunpack.c.h.b16 %v502
    %v1554 = vunpack.c.l.b16 %v503
    %v1555 = vunpack.c.h.b16 %v503
    %v1556 = vunpack.c.l.b16 %v504
    %v1557 = vunpack.c.h.b16 %v504
    %v1558 = vunpack.c.l.b16 %v505
    %v1559 = vunpack.c.l.b16 %v506
    %v1560 = vunpack.c.h.b16 %v506
    %v1561 = vunpack.c.l.b16 %v507
    %v1562 = vunpack.c.h.b16 %v507
    %v1563 = vunpack.c.l.b16 %v508
    %v1564 = vunpack.c.h.b16 %v508
    %v1565 = vunpack.c.l.b16 %v509
    %v1566 = vunpack.c.l.b16 %v510
    %v1567 = vunpack.c.h.b16 %v510
    %v1568 = vunpack.c.l.b16 %v511
    %v1569 = vunpack.c.h.b16 %v511
    %v1570 = vunpack.c.l.b16 %v512
    %v1571 = vunpack.c.h.b16 %v512
    %v1572 = vunpack.c.l.b16 %v513
    %v1573 = vunpack.c.l.b16 %v514
    %v1574 = vunpack.c.h.b16 %v514
    %v1575 = vunpack.c.l.b16 %v515
    %v1576 = vunpack.c.h.b16 %v515
    %v1577 = vunpack.c.l.b16 %v516
    %v1578 = vunpack.c.h.b16 %v516
    %v1579 = vunpack.c.l.b16 %v517
    %v1580 = vunpack.c.l.b16 %v518
    %v1581 = vunpack.c.h.b16 %v518
    %v1582 = vunpack.c.l.b16 %v519
    %v1583 = vunpack.c.h.b16 %v519
    %v1584 = vunpack.c.l.b16 %v520
    %v1585 = vunpack.c.h.b16 %v520
    %v1586 = vunpack.c.l.b16 %v521
    %v1587 = vunpack.c.l.b16 %v522
    %v1588 = vunpack.c.h.b16 %v522
    %v1589 = vunpack.c.l.b16 %v523
    %v1590 = vunpack.c.h.b16 %v523
    %v1591 = vunpack.c.l.b16 %v524
    %v1592 = vunpack.c.h.b16 %v524
    %v1593 = vunpack.c.l.b16 %v525
    %v1594 = vunpack.c.l.b16 %v526
    %v1595 = vunpack.c.h.b16 %v526
    %v1596 = vunpack.c.l.b16 %v527
    %v1597 = vunpack.c.h.b16 %v527
    %v1598 = vunpack.c.l.b16 %v528
    %v1599 = vunpack.c.h.b16 %v528
    %v1600 = vunpack.c.l.b16 %v529
    %v1601 = vunpack.c.l.b16 %v530
    %v1602 = vunpack.c.h.b16 %v530
    %v1603 = vunpack.c.l.b16 %v531
    %v1604 = vunpack.c.h.b16 %v531
    %v1605 = vunpack.c.l.b16 %v532
    %v1606 = vunpack.c.h.b16 %v532
    %v1607 = vunpack.c.l.b16 %v533
    %v1608 = vunpack.c.l.b16 %v534
    %v1609 = vunpack.c.h.b16 %v534
    %v1610 = vunpack.c.l.b16 %v535
    %v1611 = vunpack.c.h.b16 %v535
    %v1612 = vunpack.c.l.b16 %v536
    %v1613 = vunpack.c.h.b16 %v536
    %v1614 = vunpack.c.l.b16 %v537
    %v1615 = vunpack.c.l.b16 %v538
    %v1616 = vunpack.c.h.b16 %v538
    %v1617 = vunpack.c.l.b16 %v539
    %v1618 = vunpack.c.h.b16 %v539
    %v1619 = vunpack.c.l.b16 %v540
    %v1620 = vunpack.c.h.b16 %v540
    %v1621 = vunpack.c.l.b16 %v541
    %v1622 = vunpack.c.l.b16 %v542
    %v1623 = vunpack.c.h.b16 %v542
    %v1624 = vunpack.c.l.b16 %v543
    %v1625 = vunpack.c.h.b16 %v543
    %v1626 = vunpack.c.l.b16 %v544
    %v1627 = vunpack.c.h.b16 %v544
    %v1628 = vunpack.c.l.b16 %v545
    %v1629 = vunpack.c.l.b16 %v546
    %v1630 = vunpack.c.h.b16 %v546
    %v1631 = vunpack.c.l.b16 %v547
    %v1632 = vunpack.c.h.b16 %v547
    %v1633 = vunpack.c.l.b16 %v548
    %v1634 = vunpack.c.h.b16 %v548
    %v1635 = vunpack.c.l.b16 %v549
    %v1636 = vunpack.c.l.b16 %v550
    %v1637 = vunpack.c.h.b16 %v550
    %v1638 = vunpack.c.l.b16 %v551
    %v1639 = vunpack.c.h.b16 %v551
    %v1640 = vunpack.c.l.b16 %v552
    %v1641 = vunpack.c.h.b16 %v552
    %v1642 = vunpack.c.l.b16 %v553
    %v1643 = vunpack.c.l.b16 %v554
    %v1644 = vunpack.c.h.b16 %v554
    %v1645 = vunpack.c.l.b16 %v555
    %v1646 = vunpack.c.h.b16 %v555
    %v1647 = vunpack.c.l.b16 %v556
    %v1648 = vunpack.c.h.b16 %v556
    %v1649 = vunpack.c.l.b16 %v557
    %v1650 = vunpack.c.l.b16 %v558
    %v1651 = vunpack.c.h.b16 %v558
    %v1652 = vunpack.c.l.b16 %v559
    %v1653 = vunpack.c.h.b16 %v559
    %v1654 = vunpack.c.l.b16 %v560
    %v1655 = vunpack.c.h.b16 %v560
    %v1656 = vunpack.c.l.b16 %v561
    %v1657 = vunpack.c.l.b16 %v562
    %v1658 = vunpack.c.h.b16 %v562
    %v1659 = vunpack.c.l.b16 %v563
    %v1660 = vunpack.c.h.b16 %v563
    %v1661 = vunpack.c.l.b16 %v564
    %v1662 = vunpack.c.h.b16 %v564
    %v1663 = vunpack.c.l.b16 %v565
    %v1664 = vunpack.c.l.b16 %v566
    %v1665 = vunpack.c.h.b16 %v566
    %v1666 = vunpack.c.l.b16 %v567
    %v1667 = vunpack.c.h.b16 %v567
    %v1668 = vunpack.c.l.b16 %v568
    %v1669 = vunpack.c.h.b16 %v568
    %v1670 = vunpack.c.l.b16 %v569
    %v1671 = vunpack.c.l.b16 %v570
    %v1672 = vunpack.c.h.b16 %v570
    %v1673 = vunpack.c.l.b16 %v571
    %v1674 = vunpack.c.h.b16 %v571
    %v1675 = vunpack.c.l.b16 %v572
    %v1676 = vunpack.c.h.b16 %v572
    %v1677 = vunpack.c.l.b16 %v573
    %v1678 = vunpack.c.l.b16 %v574
    %v1679 = vunpack.c.h.b16 %v574
    %v1680 = vunpack.c.l.b16 %v575
    %v1681 = vunpack.c.h.b16 %v575
    %v1682 = vunpack.c.l.b16 %v576
    %v1683 = vunpack.c.h.b16 %v576
    %v1684 = vunpack.c.l.b16 %v577
    %v1685 = vunpack.c.l.b16 %v578
    %v1686 = vunpack.c.h.b16 %v578
    %v1687 = vunpack.c.l.b16 %v579
    %v1688 = vunpack.c.h.b16 %v579
    %v1689 = vunpack.c.l.b16 %v580
    %v1690 = vunpack.c.h.b16 %v580
    %v1691 = vunpack.c.l.b16 %v581
    %v1692 = vunpack.c.l.b16 %v582
    %v1693 = vunpack.c.h.b16 %v582
    %v1694 = vunpack.c.l.b16 %v583
    %v1695 = vunpack.c.h.b16 %v583
    %v1696 = vunpack.c.l.b16 %v584
    %v1697 = vunpack.c.h.b16 %v584
    %v1698 = vunpack.c.l.b16 %v585
    %v1699 = vunpack.c.l.b16 %v586
    %v1700 = vunpack.c.h.b16 %v586
    %v1701 = vunpack.c.l.b16 %v587
    %v1702 = vunpack.c.h.b16 %v587
    %v1703 = vunpack.c.l.b16 %v588
    %v1704 = vunpack.c.h.b16 %v588
    %v1705 = vunpack.c.l.b16 %v589
    %v1706 = vunpack.c.l.b16 %v590
    %v1707 = vunpack.c.h.b16 %v590
    %v1708 = vunpack.c.l.b16 %v591
    %v1709 = vunpack.c.h.b16 %v591
    %v1710 = vunpack.c.l.b16 %v592
    %v1711 = vunpack.c.h.b16 %v592
    %v1712 = vunpack.c.l.b16 %v593
    %v1713 = vunpack.c.l.b16 %v594
    %v1714 = vunpack.c.h.b16 %v594
    %v1715 = vunpack.c.l.b16 %v595
    %v1716 = vunpack.c.h.b16 %v595
    %v1717 = vunpack.c.l.b16 %v596
    %v1718 = vunpack.c.h.b16 %v596
    %v1719 = vunpack.c.l.b16 %v597
    %v1720 = vunpack.c.l.b16 %v598
    %v1721 = vunpack.c.h.b16 %v598
    %v1722 = vunpack.c.l.b16 %v599
    %v1723 = vunpack.c.h.b16 %v599
    %v1724 = vunpack.c.l.b16 %v600
    %v1725 = vunpack.c.h.b16 %v600
    %v1726 = vunpack.c.l.b16 %v601
    %v1727 = vunpack.c.l.b16 %v602
    %v1728 = vunpack.c.h.b16 %v602
    %v1729 = vunpack.c.l.b16 %v603
    %v1730 = vunpack.c.h.b16 %v603
    %v1731 = vunpack.c.l.b16 %v604
    %v1732 = vunpack.c.h.b16 %v604
    %v1733 = vunpack.c.l.b16 %v605
    %v1734 = vunpack.c.l.b16 %v606
    %v1735 = vunpack.c.h.b16 %v606
    %v1736 = vunpack.c.l.b16 %v607
    %v1737 = vunpack.c.h.b16 %v607
    %v1738 = vunpack.c.l.b16 %v608
    %v1739 = vunpack.c.h.b16 %v608
    %v1740 = vunpack.c.l.b16 %v609
    %v1741 = vunpack.c.l.b16 %v610
    %v1742 = vunpack.c.h.b16 %v610
    %v1743 = vunpack.c.l.b16 %v611
    %v1744 = vunpack.c.h.b16 %v611
    %v1745 = vunpack.c.l.b16 %v612
    %v1746 = vunpack.c.h.b16 %v612
    %v1747 = vunpack.c.l.b16 %v613
    %v1748 = vunpack.c.l.b16 %v614
    %v1749 = vunpack.c.h.b16 %v614
    %v1750 = vunpack.c.l.b16 %v615
    %v1751 = vunpack.c.h.b16 %v615
    %v1752 = vunpack.c.l.b16 %v616
    %v1753 = vunpack.c.h.b16 %v616
    %v1754 = vunpack.c.l.b16 %v617
    %v1755 = vunpack.c.l.b16 %v618
    %v1756 = vunpack.c.h.b16 %v618
    %v1757 = vunpack.c.l.b16 %v619
    %v1758 = vunpack.c.h.b16 %v619
    %v1759 = vunpack.c.l.b16 %v620
    %v1760 = vunpack.c.h.b16 %v620
    %v1761 = vunpack.c.l.b16 %v621
    %v1762 = vunpack.c.l.b16 %v622
    %v1763 = vunpack.c.h.b16 %v622
    %v1764 = vunpack.c.l.b16 %v623
    %v1765 = vunpack.c.h.b16 %v623
    %v1766 = vunpack.c.l.b16 %v624
    %v1767 = vunpack.c.h.b16 %v624
    %v1768 = vunpack.c.l.b16 %v625
    %v1769 = vunpack.c.l.b16 %v626
    %v1770 = vunpack.c.h.b16 %v626
    %v1771 = vunpack.c.l.b16 %v627
    %v1772 = vunpack.c.h.b16 %v627
    %v1773 = vunpack.c.l.b16 %v628
    %v1774 = vunpack.c.h.b16 %v628
    %v1775 = vunpack.c.l.b16 %v629
    %v1776 = vunpack.c.l.b16 %v630
    %v1777 = vunpack.c.h.b16 %v630
    %v1778 = vunpack.c.l.b16 %v631
    %v1779 = vunpack.c.h.b16 %v631
    %v1780 = vunpack.c.l.b16 %v632
    %v1781 = vunpack.c.h.b16 %v632
    %v1782 = vunpack.c.l.b16 %v633
    %v1783 = vunpack.c.l.b16 %v634
    %v1784 = vunpack.c.h.b16 %v634
    %v1785 = vunpack.c.l.b16 %v635
    %v1786 = vunpack.c.h.b16 %v635
    %v1787 = vunpack.c.l.b16 %v636
    %v1788 = vunpack.c.h.b16 %v636
    %v1789 = vunpack.c.l.b16 %v637
    %v1790 = vunpack.c.l.b16 %v638
    %v1791 = vunpack.c.h.b16 %v638
    %v1792 = vunpack.c.l.b16 %v639
    %v1793 = vunpack.c.h.b16 %v639
    %v1794 = vunpack.c.l.b16 %v640
    %v1795 = vunpack.c.h.b16 %v640
    %v1796 = vunpack.c.l.b16 %v641
    %v1797 = vunpack.c.l.b16 %v642
    %v1798 = vunpack.c.h.b16 %v642
    %v1799 = vunpack.c.l.b16 %v643
    %v1800 = vunpack.c.h.b16 %v643
    %v1801 = vunpack.c.l.b16 %v644
    %v1802 = vunpack.c.h.b16 %v644
    %v1803 = vunpack.c.l.b16 %v645
    %v1804 = vunpack.c.l.b16 %v646
    %v1805 = vunpack.c.h.b16 %v646
    %v1806 = vunpack.c.l.b16 %v647
    %v1807 = vunpack.c.h.b16 %v647
    %v1808 = vunpack.c.l.b16 %v648
    %v1809 = vunpack.c.h.b16 %v648
    %v1810 = vunpack.c.l.b16 %v649
    %v1811 = vunpack.c.l.b16 %v650
    %v1812 = vunpack.c.h.b16 %v650
    %v1813 = vunpack.c.l.b16 %v651
    %v1814 = vunpack.c.h.b16 %v651
    %v1815 = vunpack.c.l.b16 %v652
    %v1816 = vunpack.c.h.b16 %v652
    %v1817 = vunpack.c.l.b16 %v653
    %v1818 = vunpack.c.l.b16 %v654
    %v1819 = vunpack.c.h.b16 %v654
    %v1820 = vunpack.c.l.b16 %v655
    %v1821 = vunpack.c.h.b16 %v655
    %v1822 = vunpack.c.l.b16 %v656
    %v1823 = vunpack.c.h.b16 %v656
    %v1824 = vunpack.c.l.b16 %v657
    %v1825 = vunpack.c.l.b16 %v658
    %v1826 = vunpack.c.h.b16 %v658
    %v1827 = vunpack.c.l.b16 %v659
    %v1828 = vunpack.c.h.b16 %v659
    %v1829 = vunpack.c.l.b16 %v660
    %v1830 = vunpack.c.h.b16 %v660
    %v1831 = vunpack.c.l.b16 %v661
    %v1832 = vunpack.c.l.b16 %v662
    %v1833 = vunpack.c.h.b16 %v662
    %v1834 = vunpack.c.l.b16 %v663
    %v1835 = vunpack.c.h.b16 %v663
    %v1836 = vunpack.c.l.b16 %v664
    %v1837 = vunpack.c.h.b16 %v664
    %v1838 = vunpack.c.l.b16 %v665
    %v1839 = vunpack.c.l.b16 %v666
    %v1840 = vunpack.c.h.b16 %v666
    %v1841 = vunpack.c.l.b16 %v667
    %v1842 = vunpack.c.h.b16 %v667
    %v1843 = vunpack.c.l.b16 %v668
    %v1844 = vunpack.c.h.b16 %v668
    %v1845 = vunpack.c.l.b16 %v669
    %v1846 = vunpack.c.l.b16 %v670
    %v1847 = vunpack.c.h.b16 %v670
    %v1848 = vunpack.c.l.b16 %v671
    %v1849 = vunpack.c.h.b16 %v671
    %v1850 = vunpack.c.l.b16 %v672
    %v1851 = vunpack.c.h.b16 %v672
    %v1852 = vunpack.c.l.b16 %v673
    %v1853 = vunpack.c.l.b16 %v674
    %v1854 = vunpack.c.h.b16 %v674
    %v1855 = vunpack.c.l.b16 %v675
    %v1856 = vunpack.c.h.b16 %v675
    %v1857 = vunpack.c.l.b16 %v676
    %v1858 = vunpack.c.h.b16 %v676
    %v1859 = vunpack.c.l.b16 %v677
    %v1860 = vunpack.c.l.b16 %v678
    %v1861 = vunpack.c.h.b16 %v678
    %v1862 = vunpack.c.l.b16 %v679
    %v1863 = vunpack.c.h.b16 %v679
    %v1864 = vunpack.c.l.b16 %v680
    %v1865 = vunpack.c.h.b16 %v680
    %v1866 = vunpack.c.l.b16 %v681
    %v1867 = vunpack.c.l.b16 %v682
    %v1868 = vunpack.c.h.b16 %v682
    %v1869 = vunpack.c.l.b16 %v683
    %v1870 = vunpack.c.h.b16 %v683
    %v1871 = vunpack.c.l.b16 %v684
    %v1872 = vunpack.c.h.b16 %v684
    %v1873 = vunpack.c.l.b16 %v685
    %v1874 = vunpack.c.l.b16 %v686
    %v1875 = vunpack.c.h.b16 %v686
    %v1876 = vunpack.c.l.b16 %v687
    %v1877 = vunpack.c.h.b16 %v687
    %v1878 = vunpack.c.l.b16 %v688
    %v1879 = vunpack.c.h.b16 %v688
    %v1880 = vunpack.c.l.b16 %v689
    %v1881 = vunpack.c.l.b16 %v690
    %v1882 = vunpack.c.h.b16 %v690
    %v1883 = vunpack.c.l.b16 %v691
    %v1884 = vunpack.c.h.b16 %v691
    %v1885 = vunpack.c.l.b16 %v692
    %v1886 = vunpack.c.h.b16 %v692
    %v1887 = vunpack.c.l.b16 %v693
    %v1888 = vunpack.c.l.b16 %v694
    %v1889 = vunpack.c.h.b16 %v694
    %v1890 = vunpack.c.l.b16 %v695
    %v1891 = vunpack.c.h.b16 %v695
    %v1892 = vunpack.c.l.b16 %v696
    %v1893 = vunpack.c.h.b16 %v696
    %v1894 = vunpack.c.l.b16 %v697
    %v1895 = vunpack.c.l.b16 %v698
    %v1896 = vunpack.c.h.b16 %v698
    %v1897 = vunpack.c.l.b16 %v699
    %v1898 = vunpack.c.h.b16 %v699
    %v1899 = vunpack.c.l.b16 %v700
    %v1900 = vunpack.c.h.b16 %v700
    %v1901 = vunpack.c.l.b16 %v701
    %v1902 = vunpack.c.l.b16 %v702
    %v1903 = vunpack.c.h.b16 %v702
    %v1904 = vunpack.c.l.b16 %v703
    %v1905 = vunpack.c.h.b16 %v703
    %v1906 = vunpack.c.l.b16 %v704
    %v1907 = vunpack.c.h.b16 %v704
    %v1908 = vunpack.c.l.b16 %v705
    %v1909 = vunpack.c.l.b16 %v706
    %v1910 = vunpack.c.h.b16 %v706
    %v1911 = vunpack.c.l.b16 %v707
    %v1912 = vunpack.c.h.b16 %v707
    %v1913 = vunpack.c.l.b16 %v708
    %v1914 = vunpack.c.h.b16 %v708
    %v1915 = vunpack.c.l.b16 %v709
    %v1916 = vunpack.c.l.b16 %v710
    %v1917 = vunpack.c.h.b16 %v710
    %v1918 = vunpack.c.l.b16 %v711
    %v1919 = vunpack.c.h.b16 %v711
    %v1920 = vunpack.c.l.b16 %v712
    %v1921 = vunpack.c.h.b16 %v712
    %v1922 = vunpack.c.l.b16 %v713
    %v1923 = vunpack.c.l.b16 %v714
    %v1924 = vunpack.c.h.b16 %v714
    %v1925 = vunpack.c.l.b16 %v715
    %v1926 = vunpack.c.h.b16 %v715
    %v1927 = vunpack.c.l.b16 %v716
    %v1928 = vunpack.c.h.b16 %v716
    %v1929 = vunpack.c.l.b16 %v717
    %v1930 = vunpack.c.l.b16 %v718
    %v1931 = vunpack.c.h.b16 %v718
    %v1932 = vunpack.c.l.b16 %v719
    %v1933 = vunpack.c.h.b16 %v719
    %v1934 = vunpack.c.l.b16 %v720
    %v1935 = vunpack.c.h.b16 %v720
    %v1936 = vunpack.c.l.b16 %v721
    %v1937 = vunpack.c.l.b16 %v722
    %v1938 = vunpack.c.h.b16 %v722
    %v1939 = vunpack.c.l.b16 %v723
    %v1940 = vunpack.c.h.b16 %v723
    %v1941 = vunpack.c.l.b16 %v724
    %v1942 = vunpack.c.h.b16 %v724
    %v1943 = vunpack.c.l.b16 %v725
    %v1944 = vunpack.c.l.b16 %v726
    %v1945 = vunpack.c.h.b16 %v726
    %v1946 = vunpack.c.l.b16 %v727
    %v1947 = vunpack.c.h.b16 %v727
    %v1948 = vunpack.c.l.b16 %v728
    %v1949 = vunpack.c.h.b16 %v728
    %v1950 = vunpack.c.l.b16 %v729
    %v1951 = vunpack.c.l.b16 %v730
    %v1952 = vunpack.c.h.b16 %v730
    %v1953 = vunpack.c.l.b16 %v731
    %v1954 = vunpack.c.h.b16 %v731
    %v1955 = vunpack.c.l.b16 %v732
    %v1956 = vunpack.c.h.b16 %v732
    %v1957 = vunpack.c.l.b16 %v733
    %v1958 = vunpack.c.l.b16 %v734
    %v1959 = vunpack.c.h.b16 %v734
    %v1960 = vunpack.c.l.b16 %v735
    %v1961 = vunpack.c.h.b16 %v735
    %v1962 = vunpack.c.l.b16 %v736
    %v1963 = vunpack.c.h.b16 %v736
    %v1964 = vunpack.c.l.b16 %v737
    %v1965 = vunpack.c.l.b16 %v738
    %v1966 = vunpack.c.h.b16 %v738
    %v1967 = vunpack.c.l.b16 %v739
    %v1968 = vunpack.c.h.b16 %v739
    %v1969 = vunpack.c.l.b16 %v740
    %v1970 = vunpack.c.h.b16 %v740
    %v1971 = vunpack.c.l.b16 %v741
    %v1972 = vunpack.c.l.b16 %v742
    %v1973 = vunpack.c.h.b16 %v742
    %v1974 = vunpack.c.l.b16 %v743
    %v1975 = vunpack.c.h.b16 %v743
    %v1976 = vunpack.c.l.b16 %v744
    %v1977 = vunpack.c.h.b16 %v744
    %v1978 = vunpack.c.l.b16 %v745
    %v1979 = vunpack.c.l.b16 %v746
    %v1980 = vunpack.c.h.b16 %v746
    %v1981 = vunpack.c.l.b16 %v747
    %v1982 = vunpack.c.h.b16 %v747
    %v1983 = vunpack.c.l.b16 %v748
    %v1984 = vunpack.c.h.b16 %v748
    %v1985 = vunpack.c.l.b16 %v749
    %v1986 = vunpack.c.l.b16 %v750
    %v1987 = vunpack.c.h.b16 %v750
    %v1988 = vunpack.c.l.b16 %v751
    %v1989 = vunpack.c.h.b16 %v751
    %v1990 = vunpack.c.l.b16 %v752
    %v1991 = vunpack.c.h.b16 %v752
    %v1992 = vunpack.c.l.b16 %v753
    %v1993 = vunpack.c.l.b16 %v754
    %v1994 = vunpack.c.h.b16 %v754
    %v1995 = vunpack.c.l.b16 %v755
    %v1996 = vunpack.c.h.b16 %v755
    %v1997 = vunpack.c.l.b16 %v756
    %v1998 = vunpack.c.h.b16 %v756
    %v1999 = vunpack.c.l.b16 %v757
    %v2000 = vunpack.c.l.b16 %v758
    %v2001 = vunpack.c.h.b16 %v758
    %v2002 = vunpack.c.l.b16 %v759
    %v2003 = vunpack.c.h.b16 %v759
    %v2004 = vunpack.c.l.b16 %v760
    %v2005 = vunpack.c.h.b16 %v760
    %v2006 = vunpack.c.l.b16 %v761
    %v2007 = vunpack.c.l.b16 %v762
    %v2008 = vunpack.c.h.b16 %v762
    %v2009 = vunpack.c.l.b16 %v763
    %v2010 = vunpack.c.h.b16 %v763
    %v2011 = vunpack.c.l.b16 %v764
    %v2012 = vunpack.c.h.b16 %v764
    %v2013 = vunpack.c.l.b16 %v765
    %v2014 = vunpack.c.l.b16 %v766
    %v2015 = vunpack.c.h.b16 %v766
    %v2016 = vunpack.c.l.b16 %v767
    %v2017 = vunpack.c.h.b16 %v767
    %v2018 = vunpack.c.l.b16 %v768
    %v2019 = vunpack.c.h.b16 %v768
    %v2020 = vunpack.c.l.b16 %v769
    %v2021 = vunpack.c.l.b16 %v770
    %v2022 = vunpack.c.h.b16 %v770
    %v2023 = vunpack.c.l.b16 %v771
    %v2024 = vunpack.c.h.b16 %v771
    %v2025 = vunpack.c.l.b16 %v772
    %v2026 = vunpack.c.h.b16 %v772
    %v2027 = vunpack.c.l.b16 %v773
    %v2028 = vunpack.c.l.b16 %v774
    %v2029 = vunpack.c.h.b16 %v774
    %v2030 = vunpack.c.l.b16 %v775
    %v2031 = vunpack.c.h.b16 %v775
    %v2032 = vunpack.c.l.b16 %v776
    %v2033 = vunpack.c.h.b16 %v776
    %v2034 = vunpack.c.l.b16 %v777
    %v2035 = vunpack.c.l.b16 %v778
    %v2036 = vunpack.c.h.b16 %v778
    %v2037 = vunpack.c.l.b16 %v779
    %v2038 = vunpack.c.h.b16 %v779
    %v2039 = vunpack.c.l.b16 %v780
    %v2040 = vunpack.c.h.b16 %v780
    %v2041 = vunpack.c.l.b16 %v781
    %v2042 = vunpack.c.l.b16 %v782
    %v2043 = vunpack.c.h.b16 %v782
    %v2044 = vunpack.c.l.b16 %v783
    %v2045 = vunpack.c.h.b16 %v783
    %v2046 = vunpack.c.l.b16 %v784
    %v2047 = vunpack.c.h.b16 %v784
    %v2048 = vunpack.c.l.b16 %v785
    %v2049 = vunpack.c.l.b16 %v786
    %v2050 = vunpack.c.h.b16 %v786
    %v2051 = vunpack.c.l.b16 %v787
    %v2052 = vunpack.c.h.b16 %v787
    %v2053 = vunpack.c.l.b16 %v788
    %v2054 = vunpack.c.h.b16 %v788
    %v2055 = vunpack.c.l.b16 %v789
    %v2056 = vunpack.c.l.b16 %v790
    %v2057 = vunpack.c.h.b16 %v790
    %v2058 = vunpack.c.l.b16 %v791
    %v2059 = vunpack.c.h.b16 %v791
    %v2060 = vunpack.c.l.b16 %v792
    %v2061 = vunpack.c.h.b16 %v792
    %v2062 = vunpack.c.l.b16 %v793
    %v2063 = vpack.c.b16 %v1286, %v1279
    %v2064 = vpack.c.b16 %v1287, %v1280
    %v2065 = vpack.c.b16 %v1288, %v1281
    %v2066 = vpack.c.b16 %v1289, %v1282
    %v2067 = vpack.c.b16 %v1290, %v1283
    %v2068 = vpack.c.b16 %v1291, %v1284
    %v2069 = vpack.c.b16 %v1292, %v1285
    %v2070 = vpack.c.b16 %v1300, %v1293
    %v2071 = vpack.c.b16 %v1301, %v1294
    %v2072 = vpack.c.b16 %v1302, %v1295
    %v2073 = vpack.c.b16 %v1303, %v1296
    %v2074 = vpack.c.b16 %v1304, %v1297
    %v2075 = vpack.c.b16 %v1305, %v1298
    %v2076 = vpack.c.b16 %v1306, %v1299
    %v2077 = vpack.c.b16 %v1314, %v1307
    %v2078 = vpack.c.b16 %v1315, %v1308
    %v2079 = vpack.c.b16 %v1316, %v1309
    %v2080 = vpack.c.b16 %v1317, %v1310
    %v2081 = vpack.c.b16 %v1318, %v1311
    %v2082 = vpack.c.b16 %v1319, %v1312
    %v2083 = vpack.c.b16 %v1320, %v1313
    %v2084 = vpack.c.b16 %v1328, %v1321
    %v2085 = vpack.c.b16 %v1329, %v1322
    %v2086 = vpack.c.b16 %v1330, %v1323
    %v2087 = vpack.c.b16 %v1331, %v1324
    %v2088 = vpack.c.b16 %v1332, %v1325
    %v2089 = vpack.c.b16 %v1333, %v1326
    %v2090 = vpack.c.b16 %v1334, %v1327
    %v2091 = vpack.c.b16 %v1342, %v1335
    %v2092 = vpack.c.b16 %v1343, %v1336
    %v2093 = vpack.c.b16 %v1344, %v1337
    %v2094 = vpack.c.b16 %v1345, %v1338
    %v2095 = vpack.c.b16 %v1346, %v1339
    %v2096 = vpack.c.b16 %v1347, %v1340
    %v2097 = vpack.c.b16 %v1348, %v1341
    %v2098 = vpack.c.b16 %v1356, %v1349
    %v2099 = vpack.c.b16 %v1357, %v1350
    %v2100 = vpack.c.b16 %v1358, %v1351
    %v2101 = vpack.c.b16 %v1359, %v1352
    %v2102 = vpack.c.b16 %v1360, %v1353
    %v2103 = vpack.c.b16 %v1361, %v1354
    %v2104 = vpack.c.b16 %v1362, %v1355
    %v2105 = vpack.c.b16 %v1370, %v1363
    %v2106 = vpack.c.b16 %v1371, %v1364
    %v2107 = vpack.c.b16 %v1372, %v1365
    %v2108 = vpack.c.b16 %v1373, %v1366
    %v2109 = vpack.c.b16 %v1374, %v1367
    %v2110 = vpack.c.b16 %v1375, %v1368
    %v2111 = vpack.c.b16 %v1376, %v1369
    %v2112 = vpack.c.b16 %v1384, %v1377
    %v2113 = vpack.c.b16 %v1385, %v1378
    %v2114 = vpack.c.b16 %v1386, %v1379
    %v2115 = vpack.c.b16 %v1387, %v1380
    %v2116 = vpack.c.b16 %v1388, %v1381
    %v2117 = vpack.c.b16 %v1389, %v1382
    %v2118 = vpack.c.b16 %v1390, %v1383
    %v2119 = vpack.c.b16 %v1398, %v1391
    %v2120 = vpack.c.b16 %v1399, %v1392
    %v2121 = vpack.c.b16 %v1400, %v1393
    %v2122 = vpack.c.b16 %v1401, %v1394
    %v2123 = vpack.c.b16 %v1402, %v1395
    %v2124 = vpack.c.b16 %v1403, %v1396
    %v2125 = vpack.c.b16 %v1404, %v1397
    %v2126 = vpack.c.b16 %v1412, %v1405
    %v2127 = vpack.c.b16 %v1413, %v1406
    %v2128 = vpack.c.b16 %v1414, %v1407
    %v2129 = vpack.c.b16 %v1415, %v1408
    %v2130 = vpack.c.b16 %v1416, %v1409
    %v2131 = vpack.c.b16 %v1417, %v1410
    %v2132 = vpack.c.b16 %v1418, %v1411
    %v2133 = vpack.c.b16 %v1426, %v1419
    %v2134 = vpack.c.b16 %v1427, %v1420
    %v2135 = vpack.c.b16 %v1428, %v1421
    %v2136 = vpack.c.b16 %v1429, %v1422
    %v2137 = vpack.c.b16 %v1430, %v1423
    %v2138 = vpack.c.b16 %v1431, %v1424
    %v2139 = vpack.c.b16 %v1432, %v1425
    %v2140 = vpack.c.b16 %v1440, %v1433
    %v2141 = vpack.c.b16 %v1441, %v1434
    %v2142 = vpack.c.b16 %v1442, %v1435
    %v2143 = vpack.c.b16 %v1443, %v1436
    %v2144 = vpack.c.b16 %v1444, %v1437
    %v2145 = vpack.c.b16 %v1445, %v1438
    %v2146 = vpack.c.b16 %v1446, %v1439
    %v2147 = vpack.c.b16 %v1454, %v1447
    %v2148 = vpack.c.b16 %v1455, %v1448
    %v2149 = vpack.c.b16 %v1456, %v1449
    %v2150 = vpack.c.b16 %v1457, %v1450
    %v2151 = vpack.c.b16 %v1458, %v1451
    %v2152 = vpack.c.b16 %v1459, %v1452
    %v2153 = vpack.c.b16 %v1460, %v1453
    %v2154 = vpack.c.b16 %v1468, %v1461
    %v2155 = vpack.c.b16 %v1469, %v1462
    %v2156 = vpack.c.b16 %v1470, %v1463
    %v2157 = vpack.c.b16 %v1471, %v1464
    %v2158 = vpack.c.b16 %v1472, %v1465
    %v2159 = vpack.c.b16 %v1473, %v1466
    %v2160 = vpack.c.b16 %v1474, %v1467
    %v2161 = vpack.c.b16 %v1482, %v1475
    %v2162 = vpack.c.b16 %v1483, %v1476
    %v2163 = vpack.c.b16 %v1484, %v1477
    %v2164 = vpack.c.b16 %v1485, %v1478
    %v2165 = vpack.c.b16 %v1486, %v1479
    %v2166 = vpack.c.b16 %v1487, %v1480
    %v2167 = vpack.c.b16 %v1488, %v1481
    %v2168 = vpack.c.b16 %v1496, %v1489
    %v2169 = vpack.c.b16 %v1497, %v1490
    %v2170 = vpack.c.b16 %v1498, %v1491
    %v2171 = vpack.c.b16 %v1499, %v1492
    %v2172 = vpack.c.b16 %v1500, %v1493
    %v2173 = vpack.c.b16 %v1501, %v1494
    %v2174 = vpack.c.b16 %v1502, %v1495
    %v2175 = vpack.c.b16 %v1510, %v1503
    %v2176 = vpack.c.b16 %v1511, %v1504
    %v2177 = vpack.c.b16 %v1512, %v1505
    %v2178 = vpack.c.b16 %v1513, %v1506
    %v2179 = vpack.c.b16 %v1514, %v1507
    %v2180 = vpack.c.b16 %v1515, %v1508
    %v2181 = vpack.c.b16 %v1516, %v1509
    %v2182 = vpack.c.b16 %v1524, %v1517
    %v2183 = vpack.c.b16 %v1525, %v1518
    %v2184 = vpack.c.b16 %v1526, %v1519
    %v2185 = vpack.c.b16 %v1527, %v1520
    %v2186 = vpack.c.b16 %v1528, %v1521
    %v2187 = vpack.c.b16 %v1529, %v1522
    %v2188 = vpack.c.b16 %v1530, %v1523
    %v2189 = vpack.c.b16 %v1538, %v1531
    %v2190 = vpack.c.b16 %v1539, %v1532
    %v2191 = vpack.c.b16 %v1540, %v1533
    %v2192 = vpack.c.b16 %v1541, %v1534
    %v2193 = vpack.c.b16 %v1542, %v1535
    %v2194 = vpack.c.b16 %v1543, %v1536
    %v2195 = vpack.c.b16 %v1544, %v1537
    %v2196 = vpack.c.b16 %v1552, %v1545
    %v2197 = vpack.c.b16 %v1553, %v1546
    %v2198 = vpack.c.b16 %v1554, %v1547
    %v2199 = vpack.c.b16 %v1555, %v1548
    %v2200 = vpack.c.b16 %v1556, %v1549
    %v2201 = vpack.c.b16 %v1557, %v1550
    %v2202 = vpack.c.b16 %v1558, %v1551
    %v2203 = vpack.c.b16 %v1566, %v1559
    %v2204 = vpack.c.b16 %v1567, %v1560
    %v2205 = vpack.c.b16 %v1568, %v1561
    %v2206 = vpack.c.b16 %v1569, %v1562
    %v2207 = vpack.c.b16 %v1570, %v1563
    %v2208 = vpack.c.b16 %v1571, %v1564
    %v2209 = vpack.c.b16 %v1572, %v1565
    %v2210 = vpack.c.b16 %v1580, %v1573
    %v2211 = vpack.c.b16 %v1581, %v1574
    %v2212 = vpack.c.b16 %v1582, %v1575
    %v2213 = vpack.c.b16 %v1583, %v1576
    %v2214 = vpack.c.b16 %v1584, %v1577
    %v2215 = vpack.c.b16 %v1585, %v1578
    %v2216 = vpack.c.b16 %v1586, %v1579
    %v2217 = vpack.c.b16 %v1594, %v1587
    %v2218 = vpack.c.b16 %v1595, %v1588
    %v2219 = vpack.c.b16 %v1596, %v1589
    %v2220 = vpack.c.b16 %v1597, %v1590
    %v2221 = vpack.c.b16 %v1598, %v1591
    %v2222 = vpack.c.b16 %v1599, %v1592
    %v2223 = vpack.c.b16 %v1600, %v1593
    %v2224 = vpack.c.b16 %v1608, %v1601
    %v2225 = vpack.c.b16 %v1609, %v1602
    %v2226 = vpack.c.b16 %v1610, %v1603
    %v2227 = vpack.c.b16 %v1611, %v1604
    %v2228 = vpack.c.b16 %v1612, %v1605
    %v2229 = vpack.c.b16 %v1613, %v1606
    %v2230 = vpack.c.b16 %v1614, %v1607
    %v2231 = vpack.c.b16 %v1622, %v1615
    %v2232 = vpack.c.b16 %v1623, %v1616
    %v2233 = vpack.c.b16 %v1624, %v1617
    %v2234 = vpack.c.b16 %v1625, %v1618
    %v2235 = vpack.c.b16 %v1626, %v1619
    %v2236 = vpack.c.b16 %v1627, %v1620
    %v2237 = vpack.c.b16 %v1628, %v1621
    %v2238 = vpack.c.b16 %v1636, %v1629
    %v2239 = vpack.c.b16 %v1637, %v1630
    %v2240 = vpack.c.b16 %v1638, %v1631
    %v2241 = vpack.c.b16 %v1639, %v1632
    %v2242 = vpack.c.b16 %v1640, %v1633
    %v2243 = vpack.c.b16 %v1641, %v1634
    %v2244 = vpack.c.b16 %v1642, %v1635
    %v2245 = vpack.c.b16 %v1650, %v1643
    %v2246 = vpack.c.b16 %v1651, %v1644
    %v2247 = vpack.c.b16 %v1652, %v1645
    %v2248 = vpack.c.b16 %v1653, %v1646
    %v2249 = vpack.c.b16 %v1654, %v1647
    %v2250 = vpack.c.b16 %v1655, %v1648
    %v2251 = vpack.c.b16 %v1656, %v1649
    %v2252 = vpack.c.b16 %v1664, %v1657
    %v2253 = vpack.c.b16 %v1665, %v1658
    %v2254 = vpack.c.b16 %v1666, %v1659
    %v2255 = vpack.c.b16 %v1667, %v1660
    %v2256 = vpack.c.b16 %v1668, %v1661
    %v2257 = vpack.c.b16 %v1669, %v1662
    %v2258 = vpack.c.b16 %v1670, %v1663
    %v2259 = vpack.c.b16 %v1678, %v1671
    %v2260 = vpack.c.b16 %v1679, %v1672
    %v2261 = vpack.c.b16 %v1680, %v1673
    %v2262 = vpack.c.b16 %v1681, %v1674
    %v2263 = vpack.c.b16 %v1682, %v1675
    %v2264 = vpack.c.b16 %v1683, %v1676
    %v2265 = vpack.c.b16 %v1684, %v1677
    %v2266 = vpack.c.b16 %v1692, %v1685
    %v2267 = vpack.c.b16 %v1693, %v1686
    %v2268 = vpack.c.b16 %v1694, %v1687
    %v2269 = vpack.c.b16 %v1695, %v1688
    %v2270 = vpack.c.b16 %v1696, %v1689
    %v2271 = vpack.c.b16 %v1697, %v1690
    %v2272 = vpack.c.b16 %v1698, %v1691
    %v2273 = vpack.c.b16 %v1706, %v1699
    %v2274 = vpack.c.b16 %v1707, %v1700
    %v2275 = vpack.c.b16 %v1708, %v1701
    %v2276 = vpack.c.b16 %v1709, %v1702
    %v2277 = vpack.c.b16 %v1710, %v1703
    %v2278 = vpack.c.b16 %v1711, %v1704
    %v2279 = vpack.c.b16 %v1712, %v1705
    %v2280 = vpack.c.b16 %v1720, %v1713
    %v2281 = vpack.c.b16 %v1721, %v1714
    %v2282 = vpack.c.b16 %v1722, %v1715
    %v2283 = vpack.c.b16 %v1723, %v1716
    %v2284 = vpack.c.b16 %v1724, %v1717
    %v2285 = vpack.c.b16 %v1725, %v1718
    %v2286 = vpack.c.b16 %v1726, %v1719
    %v2287 = vpack.c.b16 %v1734, %v1727
    %v2288 = vpack.c.b16 %v1735, %v1728
    %v2289 = vpack.c.b16 %v1736, %v1729
    %v2290 = vpack.c.b16 %v1737, %v1730
    %v2291 = vpack.c.b16 %v1738, %v1731
    %v2292 = vpack.c.b16 %v1739, %v1732
    %v2293 = vpack.c.b16 %v1740, %v1733
    %v2294 = vpack.c.b16 %v1748, %v1741
    %v2295 = vpack.c.b16 %v1749, %v1742
    %v2296 = vpack.c.b16 %v1750, %v1743
    %v2297 = vpack.c.b16 %v1751, %v1744
    %v2298 = vpack.c.b16 %v1752, %v1745
    %v2299 = vpack.c.b16 %v1753, %v1746
    %v2300 = vpack.c.b16 %v1754, %v1747
    %v2301 = vpack.c.b16 %v1762, %v1755
    %v2302 = vpack.c.b16 %v1763, %v1756
    %v2303 = vpack.c.b16 %v1764, %v1757
    %v2304 = vpack.c.b16 %v1765, %v1758
    %v2305 = vpack.c.b16 %v1766, %v1759
    %v2306 = vpack.c.b16 %v1767, %v1760
    %v2307 = vpack.c.b16 %v1768, %v1761
    %v2308 = vpack.c.b16 %v1776, %v1769
    %v2309 = vpack.c.b16 %v1777, %v1770
    %v2310 = vpack.c.b16 %v1778, %v1771
    %v2311 = vpack.c.b16 %v1779, %v1772
    %v2312 = vpack.c.b16 %v1780, %v1773
    %v2313 = vpack.c.b16 %v1781, %v1774
    %v2314 = vpack.c.b16 %v1782, %v1775
    %v2315 = vpack.c.b16 %v1790, %v1783
    %v2316 = vpack.c.b16 %v1791, %v1784
    %v2317 = vpack.c.b16 %v1792, %v1785
    %v2318 = vpack.c.b16 %v1793, %v1786
    %v2319 = vpack.c.b16 %v1794, %v1787
    %v2320 = vpack.c.b16 %v1795, %v1788
    %v2321 = vpack.c.b16 %v1796, %v1789
    %v2322 = vpack.c.b16 %v1804, %v1797
    %v2323 = vpack.c.b16 %v1805, %v1798
    %v2324 = vpack.c.b16 %v1806, %v1799
    %v2325 = vpack.c.b16 %v1807, %v1800
    %v2326 = vpack.c.b16 %v1808, %v1801
    %v2327 = vpack.c.b16 %v1809, %v1802
    %v2328 = vpack.c.b16 %v1810, %v1803
    %v2329 = vpack.c.b16 %v1818, %v1811
    %v2330 = vpack.c.b16 %v1819, %v1812
    %v2331 = vpack.c.b16 %v1820, %v1813
    %v2332 = vpack.c.b16 %v1821, %v1814
    %v2333 = vpack.c.b16 %v1822, %v1815
    %v2334 = vpack.c.b16 %v1823, %v1816
    %v2335 = vpack.c.b16 %v1824, %v1817
    %v2336 = vpack.c.b16 %v1832, %v1825
    %v2337 = vpack.c.b16 %v1833, %v1826
    %v2338 = vpack.c.b16 %v1834, %v1827
    %v2339 = vpack.c.b16 %v1835, %v1828
    %v2340 = vpack.c.b16 %v1836, %v1829
    %v2341 = vpack.c.b16 %v1837, %v1830
    %v2342 = vpack.c.b16 %v1838, %v1831
    %v2343 = vpack.c.b16 %v1846, %v1839
    %v2344 = vpack.c.b16 %v1847, %v1840
    %v2345 = vpack.c.b16 %v1848, %v1841
    %v2346 = vpack.c.b16 %v1849, %v1842
    %v2347 = vpack.c.b16 %v1850, %v1843
    %v2348 = vpack.c.b16 %v1851, %v1844
    %v2349 = vpack.c.b16 %v1852, %v1845
    %v2350 = vpack.c.b16 %v1860, %v1853
    %v2351 = vpack.c.b16 %v1861, %v1854
    %v2352 = vpack.c.b16 %v1862, %v1855
    %v2353 = vpack.c.b16 %v1863, %v1856
    %v2354 = vpack.c.b16 %v1864, %v1857
    %v2355 = vpack.c.b16 %v1865, %v1858
    %v2356 = vpack.c.b16 %v1866, %v1859
    %v2357 = vpack.c.b16 %v1874, %v1867
    %v2358 = vpack.c.b16 %v1875, %v1868
    %v2359 = vpack.c.b16 %v1876, %v1869
    %v2360 = vpack.c.b16 %v1877, %v1870
    %v2361 = vpack.c.b16 %v1878, %v1871
    %v2362 = vpack.c.b16 %v1879, %v1872
    %v2363 = vpack.c.b16 %v1880, %v1873
    %v2364 = vpack.c.b16 %v1888, %v1881
    %v2365 = vpack.c.b16 %v1889, %v1882
    %v2366 = vpack.c.b16 %v1890, %v1883
    %v2367 = vpack.c.b16 %v1891, %v1884
    %v2368 = vpack.c.b16 %v1892, %v1885
    %v2369 = vpack.c.b16 %v1893, %v1886
    %v2370 = vpack.c.b16 %v1894, %v1887
    %v2371 = vpack.c.b16 %v1902, %v1895
    %v2372 = vpack.c.b16 %v1903, %v1896
    %v2373 = vpack.c.b16 %v1904, %v1897
    %v2374 = vpack.c.b16 %v1905, %v1898
    %v2375 = vpack.c.b16 %v1906, %v1899
    %v2376 = vpack.c.b16 %v1907, %v1900
    %v2377 = vpack.c.b16 %v1908, %v1901
    %v2378 = vpack.c.b16 %v1916, %v1909
    %v2379 = vpack.c.b16 %v1917, %v1910
    %v2380 = vpack.c.b16 %v1918, %v1911
    %v2381 = vpack.c.b16 %v1919, %v1912
    %v2382 = vpack.c.b16 %v1920, %v1913
    %v2383 = vpack.c.b16 %v1921, %v1914
    %v2384 = vpack.c.b16 %v1922, %v1915
    %v2385 = vpack.c.b16 %v1930, %v1923
    %v2386 = vpack.c.b16 %v1931, %v1924
    %v2387 = vpack.c.b16 %v1932, %v1925
    %v2388 = vpack.c.b16 %v1933, %v1926
    %v2389 = vpack.c.b16 %v1934, %v1927
    %v2390 = vpack.c.b16 %v1935, %v1928
    %v2391 = vpack.c.b16 %v1936, %v1929
    %v2392 = vpack.c.b16 %v1944, %v1937
    %v2393 = vpack.c.b16 %v1945, %v1938
    %v2394 = vpack.c.b16 %v1946, %v1939
    %v2395 = vpack.c.b16 %v1947, %v1940
    %v2396 = vpack.c.b16 %v1948, %v1941
    %v2397 = vpack.c.b16 %v1949, %v1942
    %v2398 = vpack.c.b16 %v1950, %v1943
    %v2399 = vpack.c.b16 %v1958, %v1951
    %v2400 = vpack.c.b16 %v1959, %v1952
    %v2401 = vpack.c.b16 %v1960, %v1953
    %v2402 = vpack.c.b16 %v1961, %v1954
    %v2403 = vpack.c.b16 %v1962, %v1955
    %v2404 = vpack.c.b16 %v1963, %v1956
    %v2405 = vpack.c.b16 %v1964, %v1957
    %v2406 = vpack.c.b16 %v1972, %v1965
    %v2407 = vpack.c.b16 %v1973, %v1966
    %v2408 = vpack.c.b16 %v1974, %v1967
    %v2409 = vpack.c.b16 %v1975, %v1968
    %v2410 = vpack.c.b16 %v1976, %v1969
    %v2411 = vpack.c.b16 %v1977, %v1970
    %v2412 = vpack.c.b16 %v1978, %v1971
    %v2413 = vpack.c.b16 %v1986, %v1979
    %v2414 = vpack.c.b16 %v1987, %v1980
    %v2415 = vpack.c.b16 %v1988, %v1981
    %v2416 = vpack.c.b16 %v1989, %v1982
    %v2417 = vpack.c.b16 %v1990, %v1983
    %v2418 = vpack.c.b16 %v1991, %v1984
    %v2419 = vpack.c.b16 %v1992, %v1985
    %v2420 = vpack.c.b16 %v2000, %v1993
    %v2421 = vpack.c.b16 %v2001, %v1994
    %v2422 = vpack.c.b16 %v2002, %v1995
    %v2423 = vpack.c.b16 %v2003, %v1996
    %v2424 = vpack.c.b16 %v2004, %v1997
    %v2425 = vpack.c.b16 %v2005, %v1998
    %v2426 = vpack.c.b16 %v2006, %v1999
    %v2427 = vpack.c.b16 %v2014, %v2007
    %v2428 = vpack.c.b16 %v2015, %v2008
    %v2429 = vpack.c.b16 %v2016, %v2009
    %v2430 = vpack.c.b16 %v2017, %v2010
    %v2431 = vpack.c.b16 %v2018, %v2011
    %v2432 = vpack.c.b16 %v2019, %v2012
    %v2433 = vpack.c.b16 %v2020, %v2013
    %v2434 = vpack.c.b16 %v2028, %v2021
    %v2435 = vpack.c.b16 %v2029, %v2022
    %v2436 = vpack.c.b16 %v2030, %v2023
    %v2437 = vpack.c.b16 %v2031, %v2024
    %v2438 = vpack.c.b16 %v2032, %v2025
    %v2439 = vpack.c.b16 %v2033, %v2026
    %v2440 = vpack.c.b16 %v2034, %v2027
    %v2441 = vpack.c.b16 %v2042, %v2035
    %v2442 = vpack.c.b16 %v2043, %v2036
    %v2443 = vpack.c.b16 %v2044, %v2037
    %v2444 = vpack.c.b16 %v2045, %v2038
    %v2445 = vpack.c.b16 %v2046, %v2039
    %v2446 = vpack.c.b16 %v2047, %v2040
    %v2447 = vpack.c.b16 %v2048, %v2041
    %v2448 = vpack.c.b16 %v2056, %v2049
    %v2449 = vpack.c.b16 %v2057, %v2050
    %v2450 = vpack.c.b16 %v2058, %v2051
    %v2451 = vpack.c.b16 %v2059, %v2052
    %v2452 = vpack.c.b16 %v2060, %v2053
    %v2453 = vpack.c.b16 %v2061, %v2054
    %v2454 = vpack.c.b16 %v2062, %v2055
    %2847 = vmatprep.subr.bf16.mxu0 %v2064
    %2848 = vmatpush1.bf16.msra.mxu0 %v2063
    %2849 = vmatprep.subr.bf16.mxu0 %v2071
    %2850 = vmatpush1.bf16.msra.mxu0 %v2070
    %2851 = vmatprep.subr.bf16.mxu0 %v2078
    %2852 = vmatpush1.bf16.msra.mxu0 %v2077
    %2853 = vmatprep.subr.bf16.mxu0 %v2085
    %2854 = vmatpush1.bf16.msra.mxu0 %v2084
    %2855 = vmatprep.subr.bf16.mxu0 %v2092
    %2856 = vmatpush1.bf16.msra.mxu0 %v2091
    %2857 = vmatprep.subr.bf16.mxu0 %v2099
    %2858 = vmatpush1.bf16.msra.mxu0 %v2098
    %2859 = vmatprep.subr.bf16.mxu0 %v2106
    %2860 = vmatpush1.bf16.msra.mxu0 %v2105
    %2861 = vmatprep.subr.bf16.mxu0 %v2113
    %2862 = vmatpush1.bf16.msra.mxu0 %v2112
    %2863 = vmatprep.subr.bf16.mxu0 %v2120
    %2864 = vmatpush1.bf16.msra.mxu0 %v2119
    %2865 = vmatprep.subr.bf16.mxu0 %v2127
    %2866 = vmatpush1.bf16.msra.mxu0 %v2126
    %2867 = vmatprep.subr.bf16.mxu0 %v2134
    %2868 = vmatpush1.bf16.msra.mxu0 %v2133
    %2869 = vmatprep.subr.bf16.mxu0 %v2141
    %2870 = vmatpush1.bf16.msra.mxu0 %v2140
    %2871 = vmatprep.subr.bf16.mxu0 %v2148
    %2872 = vmatpush1.bf16.msra.mxu0 %v2147
    %2873 = vmatprep.subr.bf16.mxu0 %v2155
    %2874 = vmatpush1.bf16.msra.mxu0 %v2154
    %2875 = vmatprep.subr.bf16.mxu0 %v2162
    %2876 = vmatpush1.bf16.msra.mxu0 %v2161
    %2877 = vmatprep.subr.bf16.mxu0 %v2169
    %2878 = vmatpush1.bf16.msra.mxu0 %v2168
    %2879 = vmatprep.mubr.bf16.mxu0 %v340
    %2880 = vmatmul.mubr.bf16.gmra.mrb[0].mxu0 %v339
    %v2881 = vpop.f32.mrb[0].mxu0
    %v2882 = vadd.f32 %v799, %v2881
    %v2883 = vpop.f32.mrb[0].mxu0
    %v2884 = vadd.f32 %v803, %v2883
    %v2885 = vpop.f32.mrb[0].mxu0
    %v2886 = vpop.f32.mrb[0].mxu0
    %2887 = vdwg.mxu0
    %2888 = vmatprep.subr.bf16.mxu0 %v2176
    %2889 = vmatpush1.bf16.msra.mxu0 %v2175
    %2890 = vmatprep.subr.bf16.mxu0 %v2183
    %2891 = vmatpush1.bf16.msra.mxu0 %v2182
    %2892 = vmatprep.subr.bf16.mxu0 %v2190
    %2893 = vmatpush1.bf16.msra.mxu0 %v2189
    %2894 = vmatprep.subr.bf16.mxu0 %v2197
    %2895 = vmatpush1.bf16.msra.mxu0 %v2196
    %2896 = vmatprep.subr.bf16.mxu0 %v2204
    %2897 = vmatpush1.bf16.msra.mxu0 %v2203
    %2898 = vmatprep.subr.bf16.mxu0 %v2211
    %2899 = vmatpush1.bf16.msra.mxu0 %v2210
    %2900 = vmatprep.subr.bf16.mxu0 %v2218
    %2901 = vmatpush1.bf16.msra.mxu0 %v2217
    %2902 = vmatprep.subr.bf16.mxu0 %v2225
    %2903 = vmatpush1.bf16.msra.mxu0 %v2224
    %2904 = vmatprep.subr.bf16.mxu0 %v2232
    %2905 = vmatpush1.bf16.msra.mxu0 %v2231
    %2906 = vmatprep.subr.bf16.mxu0 %v2239
    %2907 = vmatpush1.bf16.msra.mxu0 %v2238
    %2908 = vmatprep.subr.bf16.mxu0 %v2246
    %2909 = vmatpush1.bf16.msra.mxu0 %v2245
    %2910 = vmatprep.subr.bf16.mxu0 %v2253
    %2911 = vmatpush1.bf16.msra.mxu0 %v2252
    %2912 = vmatprep.subr.bf16.mxu0 %v2260
    %2913 = vmatpush1.bf16.msra.mxu0 %v2259
    %2914 = vmatprep.subr.bf16.mxu0 %v2267
    %2915 = vmatpush1.bf16.msra.mxu0 %v2266
    %2916 = vmatprep.subr.bf16.mxu0 %v2274
    %2917 = vmatpush1.bf16.msra.mxu0 %v2273
    %2918 = vmatprep.subr.bf16.mxu0 %v2281
    %2919 = vmatpush1.bf16.msra.mxu0 %v2280
    %2920 = vmatprep.mubr.bf16.mxu0 %v342
    %2921 = vmatmul.mubr.bf16.gmra.mrb[0].mxu0 %v341
    %v2922 = vpop.f32.mrb[0].mxu0
    %v2923 = vadd.f32 %v2882, %v2922
    %v2924 = vpop.f32.mrb[0].mxu0
    %v2925 = vadd.f32 %v2884, %v2924
    %v2926 = vpop.f32.mrb[0].mxu0
    %v2927 = vpop.f32.mrb[0].mxu0
    %2928 = vdwg.mxu0
    %2929 = vmatprep.subr.bf16.mxu0 %v2288
    %2930 = vmatpush1.bf16.msra.mxu0 %v2287
    %2931 = vmatprep.subr.bf16.mxu0 %v2295
    %2932 = vmatpush1.bf16.msra.mxu0 %v2294
    %2933 = vmatprep.subr.bf16.mxu0 %v2302
    %2934 = vmatpush1.bf16.msra.mxu0 %v2301
    %2935 = vmatprep.subr.bf16.mxu0 %v2309
    %2936 = vmatpush1.bf16.msra.mxu0 %v2308
    %2937 = vmatprep.subr.bf16.mxu0 %v2316
    %2938 = vmatpush1.bf16.msra.mxu0 %v2315
    %2939 = vmatprep.subr.bf16.mxu0 %v2323
    %2940 = vmatpush1.bf16.msra.mxu0 %v2322
    %2941 = vmatprep.subr.bf16.mxu0 %v2330
    %2942 = vmatpush1.bf16.msra.mxu0 %v2329
    %2943 = vmatprep.subr.bf16.mxu0 %v2337
    %2944 = vmatpush1.bf16.msra.mxu0 %v2336
    %2945 = vmatprep.subr.bf16.mxu0 %v2344
    %2946 = vmatpush1.bf16.msra.mxu0 %v2343
    %2947 = vmatprep.subr.bf16.mxu0 %v2351
    %2948 = vmatpush1.bf16.msra.mxu0 %v2350
    %2949 = vmatprep.subr.bf16.mxu0 %v2358
    %2950 = vmatpush1.bf16.msra.mxu0 %v2357
    %2951 = vmatprep.subr.bf16.mxu0 %v2365
    %2952 = vmatpush1.bf16.msra.mxu0 %v2364
    %2953 = vmatprep.subr.bf16.mxu0 %v2372
    %2954 = vmatpush1.bf16.msra.mxu0 %v2371
    %2955 = vmatprep.subr.bf16.mxu0 %v2379
    %2956 = vmatpush1.bf16.msra.mxu0 %v2378
    %2957 = vmatprep.subr.bf16.mxu0 %v2386
    %2958 = vmatpush1.bf16.msra.mxu0 %v2385
    %2959 = vmatprep.subr.bf16.mxu0 %v2393
    %2960 = vmatpush1.bf16.msra.mxu0 %v2392
    %2961 = vmatprep.mubr.bf16.mxu0 %v344
    %2962 = vmatmul.mubr.bf16.gmra.mrb[0].mxu0 %v343
    %v2963 = vpop.f32.mrb[0].mxu0
    %v2964 = vadd.f32 %v2923, %v2963
    %v2965 = vpop.f32.mrb[0].mxu0
    %v2966 = vadd.f32 %v2925, %v2965
    %v2967 = vpop.f32.mrb[0].mxu0
    %v2968 = vpop.f32.mrb[0].mxu0
    %2969 = vdwg.mxu0
    %2970 = vmatprep.subr.bf16.mxu0 %v2400
    %2971 = vmatpush1.bf16.msra.mxu0 %v2399
    %2972 = vmatprep.subr.bf16.mxu0 %v2407
    %2973 = vmatpush1.bf16.msra.mxu0 %v2406
    %2974 = vmatprep.subr.bf16.mxu0 %v2414
    %2975 = vmatpush1.bf16.msra.mxu0 %v2413
    %2976 = vmatprep.subr.bf16.mxu0 %v2421
    %2977 = vmatpush1.bf16.msra.mxu0 %v2420
    %2978 = vmatprep.subr.bf16.mxu0 %v2428
    %2979 = vmatpush1.bf16.msra.mxu0 %v2427
    %2980 = vmatprep.subr.bf16.mxu0 %v2435
    %2981 = vmatpush1.bf16.msra.mxu0 %v2434
    %2982 = vmatprep.subr.bf16.mxu0 %v2442
    %2983 = vmatpush1.bf16.msra.mxu0 %v2441
    %2984 = vmatprep.subr.bf16.mxu0 %v2449
    %2985 = vmatpush1.bf16.msra.mxu0 %v2448
    %2986 = vmatprep.subr.bf16.mxu0 0
    %2987 = vmatpush1.bf16.msra.mxu0 0
    %2988 = vmatprep.subr.bf16.mxu0 0
    %2989 = vmatpush1.bf16.msra.mxu0 0
    %2990 = vmatprep.subr.bf16.mxu0 0
    %2991 = vmatpush1.bf16.msra.mxu0 0
    %2992 = vmatprep.subr.bf16.mxu0 0
    %2993 = vmatpush1.bf16.msra.mxu0 0
    %2994 = vmatprep.subr.bf16.mxu0 0
    %2995 = vmatpush1.bf16.msra.mxu0 0
    %2996 = vmatprep.subr.bf16.mxu0 0
    %2997 = vmatpush1.bf16.msra.mxu0 0
    %2998 = vmatprep.subr.bf16.mxu0 0
    %2999 = vmatpush1.bf16.msra.mxu0 0
    %3000 = vmatprep.subr.bf16.mxu0 0
    %3001 = vmatpush1.bf16.msra.mxu0 0
    %3002 = vmatprep.mubr.bf16.mxu0 0
    %3003 = vmatmul.mubr.bf16.gmra.mrb[0].mxu0 %v345
    %v3004 = vpop.f32.mrb[0].mxu0
    %v3005 = vadd.f32 %v2964, %v3004
    %v3006 = vpop.f32.mrb[0].mxu0
    %v3007 = vadd.f32 %v2966, %v3006
    %v3008 = vpop.f32.mrb[0].mxu0
    %v3009 = vpop.f32.mrb[0].mxu0
    %3010 = vdwg.mxu0
    %3011 = vmatprep.subr.bf16.mxu0 %v2066
    %3012 = vmatpush1.bf16.msra.mxu0 %v2065
    %3013 = vmatprep.subr.bf16.mxu0 %v2073
    %3014 = vmatpush1.bf16.msra.mxu0 %v2072
    %3015 = vmatprep.subr.bf16.mxu0 %v2080
    %3016 = vmatpush1.bf16.msra.mxu0 %v2079
    %3017 = vmatprep.subr.bf16.mxu0 %v2087
    %3018 = vmatpush1.bf16.msra.mxu0 %v2086
    %3019 = vmatprep.subr.bf16.mxu0 %v2094
    %3020 = vmatpush1.bf16.msra.mxu0 %v2093
    %3021 = vmatprep.subr.bf16.mxu0 %v2101
    %3022 = vmatpush1.bf16.msra.mxu0 %v2100
    %3023 = vmatprep.subr.bf16.mxu0 %v2108
    %3024 = vmatpush1.bf16.msra.mxu0 %v2107
    %3025 = vmatprep.subr.bf16.mxu0 %v2115
    %3026 = vmatpush1.bf16.msra.mxu0 %v2114
    %3027 = vmatprep.subr.bf16.mxu0 %v2122
    %3028 = vmatpush1.bf16.msra.mxu0 %v2121
    %3029 = vmatprep.subr.bf16.mxu0 %v2129
    %3030 = vmatpush1.bf16.msra.mxu0 %v2128
    %3031 = vmatprep.subr.bf16.mxu0 %v2136
    %3032 = vmatpush1.bf16.msra.mxu0 %v2135
    %3033 = vmatprep.subr.bf16.mxu0 %v2143
    %3034 = vmatpush1.bf16.msra.mxu0 %v2142
    %3035 = vmatprep.subr.bf16.mxu0 %v2150
    %3036 = vmatpush1.bf16.msra.mxu0 %v2149
    %3037 = vmatprep.subr.bf16.mxu0 %v2157
    %3038 = vmatpush1.bf16.msra.mxu0 %v2156
    %3039 = vmatprep.subr.bf16.mxu0 %v2164
    %3040 = vmatpush1.bf16.msra.mxu0 %v2163
    %3041 = vmatprep.subr.bf16.mxu0 %v2171
    %3042 = vmatpush1.bf16.msra.mxu0 %v2170
    %3043 = vmatprep.mubr.bf16.mxu0 %v340
    %3044 = vmatmul.mubr.bf16.gmra.mrb[0].mxu0 %v339
    %v3045 = vpop.f32.mrb[0].mxu0
    %v3046 = vadd.f32 %v807, %v3045
    %v3047 = vpop.f32.mrb[0].mxu0
    %v3048 = vadd.f32 %v811, %v3047
    %v3049 = vpop.f32.mrb[0].mxu0
    %v3050 = vpop.f32.mrb[0].mxu0
    %3051 = vdwg.mxu0
    %3052 = vmatprep.subr.bf16.mxu0 %v2178
    %3053 = vmatpush1.bf16.msra.mxu0 %v2177
    %3054 = vmatprep.subr.bf16.mxu0 %v2185
    %3055 = vmatpush1.bf16.msra.mxu0 %v2184
    %3056 = vmatprep.subr.bf16.mxu0 %v2192
    %3057 = vmatpush1.bf16.msra.mxu0 %v2191
    %3058 = vmatprep.subr.bf16.mxu0 %v2199
    %3059 = vmatpush1.bf16.msra.mxu0 %v2198
    %3060 = vmatprep.subr.bf16.mxu0 %v2206
    %3061 = vmatpush1.bf16.msra.mxu0 %v2205
    %3062 = vmatprep.subr.bf16.mxu0 %v2213
    %3063 = vmatpush1.bf16.msra.mxu0 %v2212
    %3064 = vmatprep.subr.bf16.mxu0 %v2220
    %3065 = vmatpush1.bf16.msra.mxu0 %v2219
    %3066 = vmatprep.subr.bf16.mxu0 %v2227
    %3067 = vmatpush1.bf16.msra.mxu0 %v2226
    %3068 = vmatprep.subr.bf16.mxu0 %v2234
    %3069 = vmatpush1.bf16.msra.mxu0 %v2233
    %3070 = vmatprep.subr.bf16.mxu0 %v2241
    %3071 = vmatpush1.bf16.msra.mxu0 %v2240
    %3072 = vmatprep.subr.bf16.mxu0 %v2248
    %3073 = vmatpush1.bf16.msra.mxu0 %v2247
    %3074 = vmatprep.subr.bf16.mxu0 %v2255
    %3075 = vmatpush1.bf16.msra.mxu0 %v2254
    %3076 = vmatprep.subr.bf16.mxu0 %v2262
    %3077 = vmatpush1.bf16.msra.mxu0 %v2261
    %3078 = vmatprep.subr.bf16.mxu0 %v2269
    %3079 = vmatpush1.bf16.msra.mxu0 %v2268
    %3080 = vmatprep.subr.bf16.mxu0 %v2276
    %3081 = vmatpush1.bf16.msra.mxu0 %v2275
    %3082 = vmatprep.subr.bf16.mxu0 %v2283
    %3083 = vmatpush1.bf16.msra.mxu0 %v2282
    %3084 = vmatprep.mubr.bf16.mxu0 %v342
    %3085 = vmatmul.mubr.bf16.gmra.mrb[0].mxu0 %v341
    %v3086 = vpop.f32.mrb[0].mxu0
    %v3087 = vadd.f32 %v3046, %v3086
    %v3088 = vpop.f32.mrb[0].mxu0
    %v3089 = vadd.f32 %v3048, %v3088
    %v3090 = vpop.f32.mrb[0].mxu0
    %v3091 = vpop.f32.mrb[0].mxu0
    %3092 = vdwg.mxu0
    %3093 = vmatprep.subr.bf16.mxu0 %v2290
    %3094 = vmatpush1.bf16.msra.mxu0 %v2289
    %3095 = vmatprep.subr.bf16.mxu0 %v2297
    %3096 = vmatpush1.bf16.msra.mxu0 %v2296
    %3097 = vmatprep.subr.bf16.mxu0 %v2304
    %3098 = vmatpush1.bf16.msra.mxu0 %v2303
    %3099 = vmatprep.subr.bf16.mxu0 %v2311
    %3100 = vmatpush1.bf16.msra.mxu0 %v2310
    %3101 = vmatprep.subr.bf16.mxu0 %v2318
    %3102 = vmatpush1.bf16.msra.mxu0 %v2317
    %3103 = vmatprep.subr.bf16.mxu0 %v2325
    %3104 = vmatpush1.bf16.msra.mxu0 %v2324
    %3105 = vmatprep.subr.bf16.mxu0 %v2332
    %3106 = vmatpush1.bf16.msra.mxu0 %v2331
    %3107 = vmatprep.subr.bf16.mxu0 %v2339
    %3108 = vmatpush1.bf16.msra.mxu0 %v2338
    %3109 = vmatprep.subr.bf16.mxu0 %v2346
    %3110 = vmatpush1.bf16.msra.mxu0 %v2345
    %3111 = vmatprep.subr.bf16.mxu0 %v2353
    %3112 = vmatpush1.bf16.msra.mxu0 %v2352
    %3113 = vmatprep.subr.bf16.mxu0 %v2360
    %3114 = vmatpush1.bf16.msra.mxu0 %v2359
    %3115 = vmatprep.subr.bf16.mxu0 %v2367
    %3116 = vmatpush1.bf16.msra.mxu0 %v2366
    %3117 = vmatprep.subr.bf16.mxu0 %v2374
    %3118 = vmatpush1.bf16.msra.mxu0 %v2373
    %3119 = vmatprep.subr.bf16.mxu0 %v2381
    %3120 = vmatpush1.bf16.msra.mxu0 %v2380
    %3121 = vmatprep.subr.bf16.mxu0 %v2388
    %3122 = vmatpush1.bf16.msra.mxu0 %v2387
    %3123 = vmatprep.subr.bf16.mxu0 %v2395
    %3124 = vmatpush1.bf16.msra.mxu0 %v2394
    %3125 = vmatprep.mubr.bf16.mxu0 %v344
    %3126 = vmatmul.mubr.bf16.gmra.mrb[0].mxu0 %v343
    %v3127 = vpop.f32.mrb[0].mxu0
    %v3128 = vadd.f32 %v3087, %v3127
    %v3129 = vpop.f32.mrb[0].mxu0
    %v3130 = vadd.f32 %v3089, %v3129
    %v3131 = vpop.f32.mrb[0].mxu0
    %v3132 = vpop.f32.mrb[0].mxu0
    %3133 = vdwg.mxu0
    %3134 = vmatprep.subr.bf16.mxu0 %v2402
    %3135 = vmatpush1.bf16.msra.mxu0 %v2401
    %3136 = vmatprep.subr.bf16.mxu0 %v2409
    %3137 = vmatpush1.bf16.msra.mxu0 %v2408
    %3138 = vmatprep.subr.bf16.mxu0 %v2416
    %3139 = vmatpush1.bf16.msra.mxu0 %v2415
    %3140 = vmatprep.subr.bf16.mxu0 %v2423
    %3141 = vmatpush1.bf16.msra.mxu0 %v2422
    %3142 = vmatprep.subr.bf16.mxu0 %v2430
    %3143 = vmatpush1.bf16.msra.mxu0 %v2429
    %3144 = vmatprep.subr.bf16.mxu0 %v2437
    %3145 = vmatpush1.bf16.msra.mxu0 %v2436
    %3146 = vmatprep.subr.bf16.mxu0 %v2444
    %3147 = vmatpush1.bf16.msra.mxu0 %v2443
    %3148 = vmatprep.subr.bf16.mxu0 %v2451
    %3149 = vmatpush1.bf16.msra.mxu0 %v2450
    %3150 = vmatprep.subr.bf16.mxu0 0
    %3151 = vmatpush1.bf16.msra.mxu0 0
    %3152 = vmatprep.subr.bf16.mxu0 0
    %3153 = vmatpush1.bf16.msra.mxu0 0
    %3154 = vmatprep.subr.bf16.mxu0 0
    %3155 = vmatpush1.bf16.msra.mxu0 0
    %3156 = vmatprep.subr.bf16.mxu0 0
    %3157 = vmatpush1.bf16.msra.mxu0 0
    %3158 = vmatprep.subr.bf16.mxu0 0
    %3159 = vmatpush1.bf16.msra.mxu0 0
    %3160 = vmatprep.subr.bf16.mxu0 0
    %3161 = vmatpush1.bf16.msra.mxu0 0
    %3162 = vmatprep.subr.bf16.mxu0 0
    %3163 = vmatpush1.bf16.msra.mxu0 0
    %3164 = vmatprep.subr.bf16.mxu0 0
    %3165 = vmatpush1.bf16.msra.mxu0 0
    %3166 = vmatprep.mubr.bf16.mxu0 0
    %3167 = vmatmul.mubr.bf16.gmra.mrb[0].mxu0 %v345
    %v3168 = vpop.f32.mrb[0].mxu0
    %v3169 = vadd.f32 %v3128, %v3168
    %v3170 = vpop.f32.mrb[0].mxu0
    %v3171 = vadd.f32 %v3130, %v3170
    %v3172 = vpop.f32.mrb[0].mxu0
    %v3173 = vpop.f32.mrb[0].mxu0
    %3174 = vdwg.mxu0
    %3175 = vmatprep.subr.bf16.mxu0 %v2068
    %3176 = vmatpush1.bf16.msra.mxu0 %v2067
    %3177 = vmatprep.subr.bf16.mxu0 %v2075
    %3178 = vmatpush1.bf16.msra.mxu0 %v2074
    %3179 = vmatprep.subr.bf16.mxu0 %v2082
    %3180 = vmatpush1.bf16.msra.mxu0 %v2081
    %3181 = vmatprep.subr.bf16.mxu0 %v2089
    %3182 = vmatpush1.bf16.msra.mxu0 %v2088
    %3183 = vmatprep.subr.bf16.mxu0 %v2096
    %3184 = vmatpush1.bf16.msra.mxu0 %v2095
    %3185 = vmatprep.subr.bf16.mxu0 %v2103
    %3186 = vmatpush1.bf16.msra.mxu0 %v2102
    %3187 = vmatprep.subr.bf16.mxu0 %v2110
    %3188 = vmatpush1.bf16.msra.mxu0 %v2109
    %3189 = vmatprep.subr.bf16.mxu0 %v2117
    %3190 = vmatpush1.bf16.msra.mxu0 %v2116
    %3191 = vmatprep.subr.bf16.mxu0 %v2124
    %3192 = vmatpush1.bf16.msra.mxu0 %v2123
    %3193 = vmatprep.subr.bf16.mxu0 %v2131
    %3194 = vmatpush1.bf16.msra.mxu0 %v2130
    %3195 = vmatprep.subr.bf16.mxu0 %v2138
    %3196 = vmatpush1.bf16.msra.mxu0 %v2137
    %3197 = vmatprep.subr.bf16.mxu0 %v2145
    %3198 = vmatpush1.bf16.msra.mxu0 %v2144
    %3199 = vmatprep.subr.bf16.mxu0 %v2152
    %3200 = vmatpush1.bf16.msra.mxu0 %v2151
    %3201 = vmatprep.subr.bf16.mxu0 %v2159
    %3202 = vmatpush1.bf16.msra.mxu0 %v2158
    %3203 = vmatprep.subr.bf16.mxu0 %v2166
    %3204 = vmatpush1.bf16.msra.mxu0 %v2165
    %3205 = vmatprep.subr.bf16.mxu0 %v2173
    %3206 = vmatpush1.bf16.msra.mxu0 %v2172
    %3207 = vmatprep.mubr.bf16.mxu0 %v340
    %3208 = vmatmul.mubr.bf16.gmra.mrb[0].mxu0 %v339
    %v3209 = vpop.f32.mrb[0].mxu0
    %v3210 = vadd.f32 %v815, %v3209
    %v3211 = vpop.f32.mrb[0].mxu0
    %v3212 = vadd.f32 %v819, %v3211
    %v3213 = vpop.f32.mrb[0].mxu0
    %v3214 = vpop.f32.mrb[0].mxu0
    %3215 = vdwg.mxu0
    %3216 = vmatprep.subr.bf16.mxu0 %v2180
    %3217 = vmatpush1.bf16.msra.mxu0 %v2179
    %3218 = vmatprep.subr.bf16.mxu0 %v2187
    %3219 = vmatpush1.bf16.msra.mxu0 %v2186
    %3220 = vmatprep.subr.bf16.mxu0 %v2194
    %3221 = vmatpush1.bf16.msra.mxu0 %v2193
    %3222 = vmatprep.subr.bf16.mxu0 %v2201
    %3223 = vmatpush1.bf16.msra.mxu0 %v2200
    %3224 = vmatprep.subr.bf16.mxu0 %v2208
    %3225 = vmatpush1.bf16.msra.mxu0 %v2207
    %3226 = vmatprep.subr.bf16.mxu0 %v2215
    %3227 = vmatpush1.bf16.msra.mxu0 %v2214
    %3228 = vmatprep.subr.bf16.mxu0 %v2222
    %3229 = vmatpush1.bf16.msra.mxu0 %v2221
    %3230 = vmatprep.subr.bf16.mxu0 %v2229
    %3231 = vmatpush1.bf16.msra.mxu0 %v2228
    %3232 = vmatprep.subr.bf16.mxu0 %v2236
    %3233 = vmatpush1.bf16.msra.mxu0 %v2235
    %3234 = vmatprep.subr.bf16.mxu0 %v2243
    %3235 = vmatpush1.bf16.msra.mxu0 %v2242
    %3236 = vmatprep.subr.bf16.mxu0 %v2250
    %3237 = vmatpush1.bf16.msra.mxu0 %v2249
    %3238 = vmatprep.subr.bf16.mxu0 %v2257
    %3239 = vmatpush1.bf16.msra.mxu0 %v2256
    %3240 = vmatprep.subr.bf16.mxu0 %v2264
    %3241 = vmatpush1.bf16.msra.mxu0 %v2263
    %3242 = vmatprep.subr.bf16.mxu0 %v2271
    %3243 = vmatpush1.bf16.msra.mxu0 %v2270
    %3244 = vmatprep.subr.bf16.mxu0 %v2278
    %3245 = vmatpush1.bf16.msra.mxu0 %v2277
    %3246 = vmatprep.subr.bf16.mxu0 %v2285
    %3247 = vmatpush1.bf16.msra.mxu0 %v2284
    %3248 = vmatprep.mubr.bf16.mxu0 %v342
    %3249 = vmatmul.mubr.bf16.gmra.mrb[0].mxu0 %v341
    %v3250 = vpop.f32.mrb[0].mxu0
    %v3251 = vadd.f32 %v3210, %v3250
    %v3252 = vpop.f32.mrb[0].mxu0
    %v3253 = vadd.f32 %v3212, %v3252
    %v3254 = vpop.f32.mrb[0].mxu0
    %v3255 = vpop.f32.mrb[0].mxu0
    %3256 = vdwg.mxu0
    %3257 = vmatprep.subr.bf16.mxu0 %v2292
    %3258 = vmatpush1.bf16.msra.mxu0 %v2291
    %3259 = vmatprep.subr.bf16.mxu0 %v2299
    %3260 = vmatpush1.bf16.msra.mxu0 %v2298
    %3261 = vmatprep.subr.bf16.mxu0 %v2306
    %3262 = vmatpush1.bf16.msra.mxu0 %v2305
    %3263 = vmatprep.subr.bf16.mxu0 %v2313
    %3264 = vmatpush1.bf16.msra.mxu0 %v2312
    %3265 = vmatprep.subr.bf16.mxu0 %v2320
    %3266 = vmatpush1.bf16.msra.mxu0 %v2319
    %3267 = vmatprep.subr.bf16.mxu0 %v2327
    %3268 = vmatpush1.bf16.msra.mxu0 %v2326
    %3269 = vmatprep.subr.bf16.mxu0 %v2334
    %3270 = vmatpush1.bf16.msra.mxu0 %v2333
    %3271 = vmatprep.subr.bf16.mxu0 %v2341
    %3272 = vmatpush1.bf16.msra.mxu0 %v2340
    %3273 = vmatprep.subr.bf16.mxu0 %v2348
    %3274 = vmatpush1.bf16.msra.mxu0 %v2347
    %3275 = vmatprep.subr.bf16.mxu0 %v2355
    %3276 = vmatpush1.bf16.msra.mxu0 %v2354
    %3277 = vmatprep.subr.bf16.mxu0 %v2362
    %3278 = vmatpush1.bf16.msra.mxu0 %v2361
    %3279 = vmatprep.subr.bf16.mxu0 %v2369
    %3280 = vmatpush1.bf16.msra.mxu0 %v2368
    %3281 = vmatprep.subr.bf16.mxu0 %v2376
    %3282 = vmatpush1.bf16.msra.mxu0 %v2375
    %3283 = vmatprep.subr.bf16.mxu0 %v2383
    %3284 = vmatpush1.bf16.msra.mxu0 %v2382
    %3285 = vmatprep.subr.bf16.mxu0 %v2390
    %3286 = vmatpush1.bf16.msra.mxu0 %v2389
    %3287 = vmatprep.subr.bf16.mxu0 %v2397
    %3288 = vmatpush1.bf16.msra.mxu0 %v2396
    %3289 = vmatprep.mubr.bf16.mxu0 %v344
    %3290 = vmatmul.mubr.bf16.gmra.mrb[0].mxu0 %v343
    %v3291 = vpop.f32.mrb[0].mxu0
    %v3292 = vadd.f32 %v3251, %v3291
    %v3293 = vpop.f32.mrb[0].mxu0
    %v3294 = vadd.f32 %v3253, %v3293
    %v3295 = vpop.f32.mrb[0].mxu0
    %v3296 = vpop.f32.mrb[0].mxu0
    %3297 = vdwg.mxu0
    %3298 = vmatprep.subr.bf16.mxu0 %v2404
    %3299 = vmatpush1.bf16.msra.mxu0 %v2403
    %3300 = vmatprep.subr.bf16.mxu0 %v2411
    %3301 = vmatpush1.bf16.msra.mxu0 %v2410
    %3302 = vmatprep.subr.bf16.mxu0 %v2418
    %3303 = vmatpush1.bf16.msra.mxu0 %v2417
    %3304 = vmatprep.subr.bf16.mxu0 %v2425
    %3305 = vmatpush1.bf16.msra.mxu0 %v2424
    %3306 = vmatprep.subr.bf16.mxu0 %v2432
    %3307 = vmatpush1.bf16.msra.mxu0 %v2431
    %3308 = vmatprep.subr.bf16.mxu0 %v2439
    %3309 = vmatpush1.bf16.msra.mxu0 %v2438
    %3310 = vmatprep.subr.bf16.mxu0 %v2446
    %3311 = vmatpush1.bf16.msra.mxu0 %v2445
    %3312 = vmatprep.subr.bf16.mxu0 %v2453
    %3313 = vmatpush1.bf16.msra.mxu0 %v2452
    %3314 = vmatprep.subr.bf16.mxu0 0
    %3315 = vmatpush1.bf16.msra.mxu0 0
    %3316 = vmatprep.subr.bf16.mxu0 0
    %3317 = vmatpush1.bf16.msra.mxu0 0
    %3318 = vmatprep.subr.bf16.mxu0 0
    %3319 = vmatpush1.bf16.msra.mxu0 0
    %3320 = vmatprep.subr.bf16.mxu0 0
    %3321 = vmatpush1.bf16.msra.mxu0 0
    %3322 = vmatprep.subr.bf16.mxu0 0
    %3323 = vmatpush1.bf16.msra.mxu0 0
    %3324 = vmatprep.subr.bf16.mxu0 0
    %3325 = vmatpush1.bf16.msra.mxu0 0
    %3326 = vmatprep.subr.bf16.mxu0 0
    %3327 = vmatpush1.bf16.msra.mxu0 0
    %3328 = vmatprep.subr.bf16.mxu0 0
    %3329 = vmatpush1.bf16.msra.mxu0 0
    %3330 = vmatprep.mubr.bf16.mxu0 0
    %3331 = vmatmul.mubr.bf16.gmra.mrb[0].mxu0 %v345
    %v3332 = vpop.f32.mrb[0].mxu0
    %v3333 = vadd.f32 %v3292, %v3332
    %v3334 = vpop.f32.mrb[0].mxu0
    %v3335 = vadd.f32 %v3294, %v3334
    %v3336 = vpop.f32.mrb[0].mxu0
    %v3337 = vpop.f32.mrb[0].mxu0
    %3338 = vdwg.mxu0
    %3339 = vmatprep.subr.bf16.mxu0 0
    %3340 = vmatpush1.bf16.msra.mxu0 %v2069
    %3341 = vmatprep.subr.bf16.mxu0 0
    %3342 = vmatpush1.bf16.msra.mxu0 %v2076
    %3343 = vmatprep.subr.bf16.mxu0 0
    %3344 = vmatpush1.bf16.msra.mxu0 %v2083
    %3345 = vmatprep.subr.bf16.mxu0 0
    %3346 = vmatpush1.bf16.msra.mxu0 %v2090
    %3347 = vmatprep.subr.bf16.mxu0 0
    %3348 = vmatpush1.bf16.msra.mxu0 %v2097
    %3349 = vmatprep.subr.bf16.mxu0 0
    %3350 = vmatpush1.bf16.msra.mxu0 %v2104
    %3351 = vmatprep.subr.bf16.mxu0 0
    %3352 = vmatpush1.bf16.msra.mxu0 %v2111
    %3353 = vmatprep.subr.bf16.mxu0 0
    %3354 = vmatpush1.bf16.msra.mxu0 %v2118
    %3355 = vmatprep.subr.bf16.mxu0 0
    %3356 = vmatpush1.bf16.msra.mxu0 %v2125
    %3357 = vmatprep.subr.bf16.mxu0 0
    %3358 = vmatpush1.bf16.msra.mxu0 %v2132
    %3359 = vmatprep.subr.bf16.mxu0 0
    %3360 = vmatpush1.bf16.msra.mxu0 %v2139
    %3361 = vmatprep.subr.bf16.mxu0 0
    %3362 = vmatpush1.bf16.msra.mxu0 %v2146
    %3363 = vmatprep.subr.bf16.mxu0 0
    %3364 = vmatpush1.bf16.msra.mxu0 %v2153
    %3365 = vmatprep.subr.bf16.mxu0 0
    %3366 = vmatpush1.bf16.msra.mxu0 %v2160
    %3367 = vmatprep.subr.bf16.mxu0 0
    %3368 = vmatpush1.bf16.msra.mxu0 %v2167
    %3369 = vmatprep.subr.bf16.mxu0 0
    %3370 = vmatpush1.bf16.msra.mxu0 %v2174
    %3371 = vmatprep.mubr.bf16.mxu0 %v340
    %3372 = vmatmul.mubr.bf16.gmra.mrb[0].mxu0 %v339
    %v3373 = vpop.f32.mrb[0].mxu0
    %v3374 = vadd.f32 %v823, %v3373
    %v3375 = vpop.f32.mrb[0].mxu0
    %v3376 = vpop.f32.mrb[0].mxu0
    %v3377 = vpop.f32.mrb[0].mxu0
    %3378 = vdwg.mxu0
    %3379 = vmatprep.subr.bf16.mxu0 0
    %3380 = vmatpush1.bf16.msra.mxu0 %v2181
    %3381 = vmatprep.subr.bf16.mxu0 0
    %3382 = vmatpush1.bf16.msra.mxu0 %v2188
    %3383 = vmatprep.subr.bf16.mxu0 0
    %3384 = vmatpush1.bf16.msra.mxu0 %v2195
    %3385 = vmatprep.subr.bf16.mxu0 0
    %3386 = vmatpush1.bf16.msra.mxu0 %v2202
    %3387 = vmatprep.subr.bf16.mxu0 0
    %3388 = vmatpush1.bf16.msra.mxu0 %v2209
    %3389 = vmatprep.subr.bf16.mxu0 0
    %3390 = vmatpush1.bf16.msra.mxu0 %v2216
    %3391 = vmatprep.subr.bf16.mxu0 0
    %3392 = vmatpush1.bf16.msra.mxu0 %v2223
    %3393 = vmatprep.subr.bf16.mxu0 0
    %3394 = vmatpush1.bf16.msra.mxu0 %v2230
    %3395 = vmatprep.subr.bf16.mxu0 0
    %3396 = vmatpush1.bf16.msra.mxu0 %v2237
    %3397 = vmatprep.subr.bf16.mxu0 0
    %3398 = vmatpush1.bf16.msra.mxu0 %v2244
    %3399 = vmatprep.subr.bf16.mxu0 0
    %3400 = vmatpush1.bf16.msra.mxu0 %v2251
    %3401 = vmatprep.subr.bf16.mxu0 0
    %3402 = vmatpush1.bf16.msra.mxu0 %v2258
    %3403 = vmatprep.subr.bf16.mxu0 0
    %3404 = vmatpush1.bf16.msra.mxu0 %v2265
    %3405 = vmatprep.subr.bf16.mxu0 0
    %3406 = vmatpush1.bf16.msra.mxu0 %v2272
    %3407 = vmatprep.subr.bf16.mxu0 0
    %3408 = vmatpush1.bf16.msra.mxu0 %v2279
    %3409 = vmatprep.subr.bf16.mxu0 0
    %3410 = vmatpush1.bf16.msra.mxu0 %v2286
    %3411 = vmatprep.mubr.bf16.mxu0 %v342
    %3412 = vmatmul.mubr.bf16.gmra.mrb[0].mxu0 %v341
    %v3413 = vpop.f32.mrb[0].mxu0
    %v3414 = vadd.f32 %v3374, %v3413
    %v3415 = vpop.f32.mrb[0].mxu0
    %v3416 = vpop.f32.mrb[0].mxu0
    %v3417 = vpop.f32.mrb[0].mxu0
    %3418 = vdwg.mxu0
    %3419 = vmatprep.subr.bf16.mxu0 0
    %3420 = vmatpush1.bf16.msra.mxu0 %v2293
    %3421 = vmatprep.subr.bf16.mxu0 0
    %3422 = vmatpush1.bf16.msra.mxu0 %v2300
    %3423 = vmatprep.subr.bf16.mxu0 0
    %3424 = vmatpush1.bf16.msra.mxu0 %v2307
    %3425 = vmatprep.subr.bf16.mxu0 0
    %3426 = vmatpush1.bf16.msra.mxu0 %v2314
    %3427 = vmatprep.subr.bf16.mxu0 0
    %3428 = vmatpush1.bf16.msra.mxu0 %v2321
    %3429 = vmatprep.subr.bf16.mxu0 0
    %3430 = vmatpush1.bf16.msra.mxu0 %v2328
    %3431 = vmatprep.subr.bf16.mxu0 0
    %3432 = vmatpush1.bf16.msra.mxu0 %v2335
    %3433 = vmatprep.subr.bf16.mxu0 0
    %3434 = vmatpush1.bf16.msra.mxu0 %v2342
    %3435 = vmatprep.subr.bf16.mxu0 0
    %3436 = vmatpush1.bf16.msra.mxu0 %v2349
    %3437 = vmatprep.subr.bf16.mxu0 0
    %3438 = vmatpush1.bf16.msra.mxu0 %v2356
    %3439 = vmatprep.subr.bf16.mxu0 0
    %3440 = vmatpush1.bf16.msra.mxu0 %v2363
    %3441 = vmatprep.subr.bf16.mxu0 0
    %3442 = vmatpush1.bf16.msra.mxu0 %v2370
    %3443 = vmatprep.subr.bf16.mxu0 0
    %3444 = vmatpush1.bf16.msra.mxu0 %v2377
    %3445 = vmatprep.subr.bf16.mxu0 0
    %3446 = vmatpush1.bf16.msra.mxu0 %v2384
    %3447 = vmatprep.subr.bf16.mxu0 0
    %3448 = vmatpush1.bf16.msra.mxu0 %v2391
    %3449 = vmatprep.subr.bf16.mxu0 0
    %3450 = vmatpush1.bf16.msra.mxu0 %v2398
    %3451 = vmatprep.mubr.bf16.mxu0 %v344
    %3452 = vmatmul.mubr.bf16.gmra.mrb[0].mxu0 %v343
    %v3453 = vpop.f32.mrb[0].mxu0
    %v3454 = vadd.f32 %v3414, %v3453
    %v3455 = vpop.f32.mrb[0].mxu0
    %v3456 = vpop.f32.mrb[0].mxu0
    %v3457 = vpop.f32.mrb[0].mxu0
    %3458 = vdwg.mxu0
    %3459 = vmatprep.subr.bf16.mxu0 0
    %3460 = vmatpush1.bf16.msra.mxu0 %v2405
    %3461 = vmatprep.subr.bf16.mxu0 0
    %3462 = vmatpush1.bf16.msra.mxu0 %v2412
    %3463 = vmatprep.subr.bf16.mxu0 0
    %3464 = vmatpush1.bf16.msra.mxu0 %v2419
    %3465 = vmatprep.subr.bf16.mxu0 0
    %3466 = vmatpush1.bf16.msra.mxu0 %v2426
    %3467 = vmatprep.subr.bf16.mxu0 0
    %3468 = vmatpush1.bf16.msra.mxu0 %v2433
    %3469 = vmatprep.subr.bf16.mxu0 0
    %3470 = vmatpush1.bf16.msra.mxu0 %v2440
    %3471 = vmatprep.subr.bf16.mxu0 0
    %3472 = vmatpush1.bf16.msra.mxu0 %v2447
    %3473 = vmatprep.subr.bf16.mxu0 0
    %3474 = vmatpush1.bf16.msra.mxu0 %v2454
    %3475 = vmatprep.subr.bf16.mxu0 0
    %3476 = vmatpush1.bf16.msra.mxu0 0
    %3477 = vmatprep.subr.bf16.mxu0 0
    %3478 = vmatpush1.bf16.msra.mxu0 0
    %3479 = vmatprep.subr.bf16.mxu0 0
    %3480 = vmatpush1.bf16.msra.mxu0 0
    %3481 = vmatprep.subr.bf16.mxu0 0
    %3482 = vmatpush1.bf16.msra.mxu0 0
    %3483 = vmatprep.subr.bf16.mxu0 0
    %3484 = vmatpush1.bf16.msra.mxu0 0
    %3485 = vmatprep.subr.bf16.mxu0 0
    %3486 = vmatpush1.bf16.msra.mxu0 0
    %3487 = vmatprep.subr.bf16.mxu0 0
    %3488 = vmatpush1.bf16.msra.mxu0 0
    %3489 = vmatprep.subr.bf16.mxu0 0
    %3490 = vmatpush1.bf16.msra.mxu0 0
    %3491 = vmatprep.mubr.bf16.mxu0 0
    %3492 = vmatmul.mubr.bf16.gmra.mrb[0].mxu0 %v345
    %v3493 = vpop.f32.mrb[0].mxu0
    %v3494 = vadd.f32 %v3454, %v3493
    %v3495 = vpop.f32.mrb[0].mxu0
    %v3496 = vpop.f32.mrb[0].mxu0
    %v3497 = vpop.f32.mrb[0].mxu0
    %3498 = vdwg.mxu0
    %v3499 = vand.u32 2147483647, %v3005
    %v3500 = vand.u32 2147483647, %v3007
    %v3501 = vand.u32 2147483647, %v3169
    %v3502 = vand.u32 2147483647, %v3171
    %v3503 = vand.u32 2147483647, %v3333
    %v3504 = vand.u32 2147483647, %v3335
    %v3505 = vand.u32 2147483647, %v3494
    %v3506 = vsub.f32 0.0, %v3499
    %v3507 = vsub.f32 0.0, %v3500
    %v3508 = vsub.f32 0.0, %v3501
    %v3509 = vsub.f32 0.0, %v3502
    %v3510 = vsub.f32 0.0, %v3503
    %v3511 = vsub.f32 0.0, %v3504
    %v3512 = vsub.f32 0.0, %v3505
    %v3513 = vmul.f32 %v3506, 1.442695
    %v3514 = vpow.pop %v3513
    %v3515 = vmul.f32 %v3507, 1.442695
    %v3516 = vpow.pop %v3515
    %v3517 = vmul.f32 %v3508, 1.442695
    %v3518 = vpow.pop %v3517
    %v3519 = vmul.f32 %v3509, 1.442695
    %v3520 = vpow.pop %v3519
    %v3521 = vmul.f32 %v3510, 1.442695
    %v3522 = vpow.pop %v3521
    %v3523 = vmul.f32 %v3511, 1.442695
    %v3524 = vpow.pop %v3523
    %v3525 = vmul.f32 %v3512, 1.442695
    %v3526 = vpow.pop %v3525
    %v3527 = vadd.f32 %v3514, 1.0
    %v3528 = vadd.f32 %v3516, 1.0
    %v3529 = vadd.f32 %v3518, 1.0
    %v3530 = vadd.f32 %v3520, 1.0
    %v3531 = vadd.f32 %v3522, 1.0
    %v3532 = vadd.f32 %v3524, 1.0
    %v3533 = vadd.f32 %v3526, 1.0
    %v3534 = vrcp.pop %v3527
    %v3535 = vmul.f32 1.0, %v3534
    %v3536 = vrcp.pop %v3528
    %v3537 = vmul.f32 1.0, %v3536
    %v3538 = vrcp.pop %v3529
    %v3539 = vmul.f32 1.0, %v3538
    %v3540 = vrcp.pop %v3530
    %v3541 = vmul.f32 1.0, %v3540
    %v3542 = vrcp.pop %v3531
    %v3543 = vmul.f32 1.0, %v3542
    %v3544 = vrcp.pop %v3532
    %v3545 = vmul.f32 1.0, %v3544
    %v3546 = vrcp.pop %v3533
    %v3547 = vmul.f32 1.0, %v3546
    %vm3548 = vcmp.ge.f32.partialorder %v3005, 0.0
    %vm3549 = vcmp.ge.f32.partialorder %v3007, 0.0
    %vm3550 = vcmp.ge.f32.partialorder %v3169, 0.0
    %vm3551 = vcmp.ge.f32.partialorder %v3171, 0.0
    %vm3552 = vcmp.ge.f32.partialorder %v3333, 0.0
    %vm3553 = vcmp.ge.f32.partialorder %v3335, 0.0
    %vm3554 = vcmp.ge.f32.partialorder %v3494, 0.0
    %v3555 = vmul.f32 %v3514, %v3535
    %v3556 = vmul.f32 %v3516, %v3537
    %v3557 = vmul.f32 %v3518, %v3539
    %v3558 = vmul.f32 %v3520, %v3541
    %v3559 = vmul.f32 %v3522, %v3543
    %v3560 = vmul.f32 %v3524, %v3545
    %v3561 = vmul.f32 %v3526, %v3547
    %v3562 = vsel %vm3548, %v3535, %v3555
    %v3563 = vsel %vm3549, %v3537, %v3556
    %v3564 = vsel %vm3550, %v3539, %v3557
    %v3565 = vsel %vm3551, %v3541, %v3558
    %v3566 = vsel %vm3552, %v3543, %v3559
    %v3567 = vsel %vm3553, %v3545, %v3560
    %v3568 = vsel %vm3554, %v3547, %v3561
    %v3576 = vcombine.low %v3562, %v3563
    %v3577 = vcombine.low %v3564, %v3565
    %v3579 = vunpack.c.l.s4 1983009808
    %v3580 = vunpack.c.0.s8 %v3579
    %v3581 = vlaneseq
    %v3582 = vshrl.u32 %v3581, 7
    %v3583 = vsub.s32 %v3580, %v3582
    %v3584 = vrot.slane %v3576, %v3583
    %v3586 = vunpack.c.l.s4 1983009808
    %v3587 = vunpack.c.0.s8 %v3586
    %v3588 = vlaneseq
    %v3589 = vshrl.u32 %v3588, 7
    %v3590 = vsub.s32 %v3587, %v3589
    %v3591 = vrot.slane %v3577, %v3590
    %v3592 = vcombine.low %v3584, %v3591
    %v3593 = vcombine.low %v3566, %v3567
    %v3595 = vunpack.c.l.s4 1983009808
    %v3596 = vunpack.c.0.s8 %v3595
    %v3597 = vlaneseq
    %v3598 = vshrl.u32 %v3597, 7
    %v3599 = vsub.s32 %v3596, %v3598
    %v3600 = vrot.slane %v3593, %v3599
    %v3602 = vunpack.c.l.s4 1983009808
    %v3603 = vunpack.c.0.s8 %v3602
    %v3604 = vlaneseq
    %v3605 = vshrl.u32 %v3604, 7
    %v3606 = vsub.s32 %v3603, %v3605
    %v3607 = vrot.slane %v3568, %v3606
    %v3608 = vcombine.low %v3600, %v3607
    %3611 = vst [vmem:[#allocation11] sm:$0xff] %v3592
    %3612 = vst [vmem:[#allocation11 + $0x8] sm:$0x3f] %v3608
    // Predicated region
    $region42: #{tpu_custom_call.1} parent=1 // pred_check
      _
    $region43: #{tpu_custom_call.1} parent=1 // pred_check_branch
      %3614 = sbr.rel (0) target = $region45
    $region44: #{tpu_custom_call.1} parent=1 // pred_region
      %s3616 = ssub.s32 224, 224
      %3617 = vsyncadd [#allocation4], %s3616
      %s3619 = sshll.u32 [#allocation11], 4
      %s3620 = int_to_ptr.vmem [resolvable:$true] %s3619
      %3622 = dma.vmem_to_hbm [thread:$0]  %s3620, 224, %s5, [#allocation4]
    $region45: #{tpu_custom_call.1} parent=1 // pred_fallthru
      _
    // Predicated region
    $region46: #{tpu_custom_call.1} parent=1 // pred_check
      _
    $region47: #{tpu_custom_call.1} parent=1 // pred_check_branch
      %3624 = sbr.rel (0) target = $region49
    $region48: #{tpu_custom_call.1} parent=1 // pred_region
      %3625 = dma.done [#allocation4], 224
    $region49: #{tpu_custom_call.1} parent=1 // pred_fallthru
      _
    %3626 = vsyncpa [#allocation3], 1
    %3627 = vsyncpa [#allocation6], 1
    %3628 = vsyncpa [#allocation9], 1
    %3629 = vsyncpa [#allocation4], 1

</llo_original>
